<compile_context>
chip_gen: v6e
topology: v6e:2x2x1
jax: 0.10.0
libtpu: 0.0.40
codegen_flags: <defaults>
</compile_context>

<pallas_src>
import jax
import jax.numpy as jnp
import numpy as np
from jax import lax
from jax.experimental import pallas as pl
from jax.experimental.pallas import tpu as pltpu


def lstm_last_hidden_kernel(emb2d_ref, wih_ref, whh_ref, bias_ref, out_ref,
                            gx_scr):
    # emb2d_ref: (S*Bp, E)   bf16, time-major flattened embeddings (row = t*Bp + b)
    # wih_ref:   (E, 4*Hp)   bf16, W_ih^T, gate order [i, f, g, o], gate-padded to Hp
    # whh_ref:   (Hp, 4*Hp)  bf16, W_hh^T, rows and gate columns padded to Hp
    # bias_ref:  (1, 4*Hp)   f32,  b_ih + b_hh, gate-padded
    # out_ref:   (Bp, Hp)    f32,  final hidden state (valid block is [:B, :H])
    # gx_scr:    (S*Bp, 4*Hp) f32 VMEM scratch for the hoisted input projection
    Bp = out_ref.shape[0]
    Hp = out_ref.shape[1]
    S = emb2d_ref.shape[0] // Bp

    # ---- Hoisted, batched input projection -> VMEM scratch (bias added once).
    gx_scr[...] = (
        jnp.dot(emb2d_ref[...], wih_ref[...],
                preferred_element_type=jnp.float32)
        + bias_ref[...]
    )

    def sigmoid1(x):
        # One EUP op instead of exp + divide.
        return 0.5 * (jnp.tanh(0.5 * x) + 1.0)

    # ---- Recurrence: only h@W_hh^T + gate elementwise math per step.
    def step(t, carry):
        h, c = carry
        gx_t = gx_scr[pl.ds(t * Bp, Bp), :]                       # (Bp, 4Hp) f32
        g = gx_t + jnp.dot(h.astype(whh_ref.dtype), whh_ref[...],
                           preferred_element_type=jnp.float32)    # (Bp, 4Hp)
        # 128-lane-aligned gate splits (each gate chunk is Hp wide).
        i_g = sigmoid1(g[:, 0 * Hp:1 * Hp])
        f_g = sigmoid1(g[:, 1 * Hp:2 * Hp])
        g_g = jnp.tanh(g[:, 2 * Hp:3 * Hp])
        o_g = sigmoid1(g[:, 3 * Hp:4 * Hp])
        c = f_g * c + i_g * g_g
        h = o_g * jnp.tanh(c)
        # Padded columns provably stay zero: their gates see 0 pre-activations
        # -> i=f=o=0.5, g=0 -> c_pad stays 0, h_pad = 0.5*tanh(0) = 0, and the
        # padded W_hh rows only ever multiply h_pad = 0.
        return (h, c)

    h0 = jnp.zeros((Bp, Hp), jnp.float32)
    c0 = jnp.zeros((Bp, Hp), jnp.float32)
    h_final, _ = lax.fori_loop(0, S, step, (h0, c0), unroll=True)

    out_ref[...] = h_final


def _round_up(x, m):
    return ((x + m - 1) // m) * m


def _pad_gate_cols(m, H, Hp):
    """Pad each of the 4 gate chunks (width H) of the last dim to width Hp."""
    parts = []
    for g in range(4):
        chunk = m[..., g * H:(g + 1) * H]
        pad = [(0, 0)] * (m.ndim - 1) + [(0, Hp - H)]
        parts.append(jnp.pad(chunk, pad))
    return jnp.concatenate(parts, axis=-1)


def prepare_text_encoder_params(embed_table, w_ih, w_hh, b_ih, b_hh):
    """One-time weight prep (gate padding, transpose, bias fold, bf16 cast)."""
    H = w_hh.shape[1]
    Hp = _round_up(H, 128)                                        # per-gate lane width
    wih_p = _pad_gate_cols(w_ih.T, H, Hp).astype(jnp.bfloat16)    # (E, 4Hp)
    whh_p = _pad_gate_cols(w_hh.T, H, Hp)                         # (H, 4Hp)
    whh_p = jnp.pad(whh_p, ((0, Hp - H), (0, 0))).astype(jnp.bfloat16)  # (Hp, 4Hp)
    bias_p = _pad_gate_cols((b_ih + b_hh).reshape(1, 4 * H), H, Hp).astype(
        jnp.float32)                                              # (1, 4Hp)
    return dict(embed_table=embed_table, wih_p=wih_p, whh_p=whh_p,
                bias_p=bias_p, H=H, Hp=Hp)


def text_encoder_forward(tokens, params):
    """tokens: (B, S) int32. Returns (B, H) float32 == hidden.squeeze(0)."""
    B, S = tokens.shape
    embed_table = params["embed_table"]
    wih_p, whh_p, bias_p = params["wih_p"], params["whh_p"], params["bias_p"]
    H, Hp = params["H"], params["Hp"]
    E = embed_table.shape[1]
    Bp = _round_up(B, 8)                                          # sublane-aligned batch

    # Time-major gather directly (no (B,S,E) transpose round-trip). Padded
    # batch rows reuse token 0; they never influence the real rows and are
    # sliced off at the end.
    # TODO(synk): move this gather in-kernel via scalar-prefetched token ids.
    tok_tm = tokens.T                                             # (S, B)
    if Bp != B:
        tok_tm = jnp.pad(tok_tm, ((0, 0), (0, Bp - B)))
    emb2d = jnp.take(embed_table, tok_tm.reshape(-1), axis=0)     # (S*Bp, E)
    emb2d = emb2d.astype(jnp.bfloat16)

    cost = pl.CostEstimate(
        flops=2 * S * Bp * E * 4 * Hp + 2 * S * Bp * Hp * 4 * Hp,
        transcendentals=5 * S * Bp * Hp,
        bytes_accessed=(emb2d.size * 2 + wih_p.size * 2 + whh_p.size * 2
                        + bias_p.size * 4 + Bp * Hp * 4),
    )

    out_p = pl.pallas_call(
        lstm_last_hidden_kernel,
        out_shape=jax.ShapeDtypeStruct((Bp, Hp), jnp.float32),
        in_specs=[
            pl.BlockSpec(memory_space=pltpu.MemorySpace.VMEM),
            pl.BlockSpec(memory_space=pltpu.MemorySpace.VMEM),
            pl.BlockSpec(memory_space=pltpu.MemorySpace.VMEM),
            pl.BlockSpec(memory_space=pltpu.MemorySpace.VMEM),
        ],
        out_specs=pl.BlockSpec(memory_space=pltpu.MemorySpace.VMEM),
        scratch_shapes=[pltpu.VMEM((S * Bp, 4 * Hp), jnp.float32)],
        compiler_params=pltpu.CompilerParams(
            vmem_limit_bytes=32 * 1024 * 1024),
        cost_estimate=cost,
    )(emb2d, wih_p, whh_p, bias_p)

    return out_p[:B, :H]                                          # (B, H)


def text_encoder_reference(tokens, embed_table, w_ih, w_hh, b_ih, b_hh):
    """Pure-JAX reference matching PyTorch nn.LSTM semantics (gate order ifgo)."""
    B, S = tokens.shape
    H = w_hh.shape[1]
    emb = jnp.take(embed_table, tokens, axis=0)                   # (B, S, E)

    def step(carry, x_t):
        h, c = carry
        gates = x_t @ w_ih.T + h @ w_hh.T + b_ih + b_hh
        i_g = jax.nn.sigmoid(gates[:, 0 * H:1 * H])
        f_g = jax.nn.sigmoid(gates[:, 1 * H:2 * H])
        g_g = jnp.tanh(gates[:, 2 * H:3 * H])
        o_g = jax.nn.sigmoid(gates[:, 3 * H:4 * H])
        c = f_g * c + i_g * g_g
        h = o_g * jnp.tanh(c)
        return (h, c), None

    h0 = jnp.zeros((B, H), jnp.float32)
    c0 = jnp.zeros((B, H), jnp.float32)
    (h_final, _), _ = lax.scan(step, (h0, c0), jnp.transpose(emb, (1, 0, 2)))
    return h_final


if __name__ == "__main__":
    vocab_size = 50
    embed_dim = 32
    hidden_dim = 64
    batch = 8
    seq = 8

    key = jax.random.PRNGKey(0)
    k_emb, k_wih, k_whh, k_bih, k_bhh, k_tok = jax.random.split(key, 6)

    bound = 1.0 / np.sqrt(hidden_dim)
    embed_table = jax.random.normal(k_emb, (vocab_size, embed_dim), jnp.float32)
    w_ih = jax.random.uniform(k_wih, (4 * hidden_dim, embed_dim), jnp.float32,
                              minval=-bound, maxval=bound)
    w_hh = jax.random.uniform(k_whh, (4 * hidden_dim, hidden_dim), jnp.float32,
                              minval=-bound, maxval=bound)
    b_ih = jax.random.uniform(k_bih, (4 * hidden_dim,), jnp.float32,
                              minval=-bound, maxval=bound)
    b_hh = jax.random.uniform(k_bhh, (4 * hidden_dim,), jnp.float32,
                              minval=-bound, maxval=bound)
    tokens = jax.random.randint(k_tok, (batch, seq), 0, vocab_size, jnp.int32)

    params = prepare_text_encoder_params(embed_table, w_ih, w_hh, b_ih, b_hh)
    out = text_encoder_forward(tokens, params)
    out = jax.block_until_ready(out)

    ref = text_encoder_reference(tokens, embed_table, w_ih, w_hh, b_ih, b_hh)
    # bf16 MXU operands (f32 accumulation / f32 state) -> relaxed tolerance.
    np.testing.assert_allclose(np.asarray(out), np.asarray(ref),
                               rtol=2e-2, atol=2e-2)

    assert out.shape == (batch, hidden_dim)
    print("KERNEL_OK")
</pallas_src>

<mosaic_0001>
module attributes {stable_mosaic.version = 11 : i64} {
  func.func @lstm_last_hidden_kernel(%arg0: memref<64x32xbf16, #tpu.memory_space<vmem>>, %arg1: memref<32x512xbf16, #tpu.memory_space<vmem>>, %arg2: memref<128x512xbf16, #tpu.memory_space<vmem>>, %arg3: memref<1x512xf32, #tpu.memory_space<vmem>>, %arg4: memref<8x128xf32, #tpu.memory_space<vmem>>, %arg5: memref<64x512xf32, #tpu.memory_space<vmem>>) attributes {dimension_semantics = [], scalar_prefetch = 0 : i64, scratch_operands = 1 : i64, tpu.core_type = #tpu.core_type<tc>} {
    %c0 = arith.constant 0 : index
    %c0_0 = arith.constant 0 : index
    %0 = vector.load %arg0[%c0, %c0_0] : memref<64x32xbf16, #tpu.memory_space<vmem>>, vector<64x32xbf16>
    %c0_1 = arith.constant 0 : index
    %c0_2 = arith.constant 0 : index
    %1 = vector.load %arg1[%c0_1, %c0_2] : memref<32x512xbf16, #tpu.memory_space<vmem>>, vector<32x512xbf16>
    %cst = arith.constant dense<0.000000e+00> : vector<64x512xf32>
    %2 = tpu.matmul %0, %1, %cst {dimension_numbers = #tpu.dot_dimension_numbers<[1], [0], [0], [1], [0, 0, 1, 1], [], []>} : vector<64x32xbf16>, vector<32x512xbf16>, vector<64x512xf32> -> vector<64x512xf32>
    %c0_3 = arith.constant 0 : index
    %c0_4 = arith.constant 0 : index
    %3 = vector.load %arg3[%c0_3, %c0_4] : memref<1x512xf32, #tpu.memory_space<vmem>>, vector<1x512xf32>
    %4 = vector.broadcast %3 : vector<1x512xf32> to vector<64x512xf32>
    %5 = arith.addf %2, %4 : vector<64x512xf32>
    %c0_5 = arith.constant 0 : index
    %c0_6 = arith.constant 0 : index
    %6 = vector.load %arg5[%c0_5, %c0_6] : memref<64x512xf32, #tpu.memory_space<vmem>>, vector<64x512xf32>
    tpu.vector_store %arg5[%c0_5, %c0_6], %5 {strides = array<i32>} : memref<64x512xf32, #tpu.memory_space<vmem>>, vector<64x512xf32>,
    %cst_7 = arith.constant 0.000000e+00 : f32
    %7 = vector.broadcast %cst_7 : f32 to vector<8x128xf32>
    %cst_8 = arith.constant 0.000000e+00 : f32
    %8 = vector.broadcast %cst_8 : f32 to vector<8x128xf32>
    %c0_i32 = arith.constant 0 : i32
    %c8_i32 = arith.constant 8 : i32
    %9 = arith.muli %c0_i32, %c8_i32 : i32
    %10 = arith.index_cast %9 : i32 to index
    %c0_9 = arith.constant 0 : index
    %11 = vector.load %arg5[%10, %c0_9] : memref<64x512xf32, #tpu.memory_space<vmem>>, vector<8x512xf32>
    %12 = arith.truncf %7 : vector<8x128xf32> to vector<8x128xbf16>
    %c0_10 = arith.constant 0 : index
    %c0_11 = arith.constant 0 : index
    %13 = vector.load %arg2[%c0_10, %c0_11] : memref<128x512xbf16, #tpu.memory_space<vmem>>, vector<128x512xbf16>
    %cst_12 = arith.constant dense<0.000000e+00> : vector<8x512xf32>
    %14 = tpu.matmul %12, %13, %cst_12 {dimension_numbers = #tpu.dot_dimension_numbers<[1], [0], [0], [1], [0, 0, 1, 1], [], []>} : vector<8x128xbf16>, vector<128x512xbf16>, vector<8x512xf32> -> vector<8x512xf32>
    %15 = arith.addf %11, %14 : vector<8x512xf32>
    %16 = vector.extract_strided_slice %15 {offsets = [0, 0], sizes = [8, 128], strides = [1, 1]} : vector<8x512xf32> to vector<8x128xf32>
    %cst_13 = arith.constant 5.000000e-01 : f32
    %17 = vector.broadcast %cst_13 : f32 to vector<8x128xf32>
    %18 = arith.mulf %17, %16 : vector<8x128xf32>
    %19 = math.tanh %18 : vector<8x128xf32>
    %cst_14 = arith.constant 1.000000e+00 : f32
    %20 = vector.broadcast %cst_14 : f32 to vector<8x128xf32>
    %21 = arith.addf %19, %20 : vector<8x128xf32>
    %cst_15 = arith.constant 5.000000e-01 : f32
    %22 = vector.broadcast %cst_15 : f32 to vector<8x128xf32>
    %23 = arith.mulf %22, %21 : vector<8x128xf32>
    %24 = vector.extract_strided_slice %15 {offsets = [0, 128], sizes = [8, 128], strides = [1, 1]} : vector<8x512xf32> to vector<8x128xf32>
    %cst_16 = arith.constant 5.000000e-01 : f32
    %25 = vector.broadcast %cst_16 : f32 to vector<8x128xf32>
    %26 = arith.mulf %25, %24 : vector<8x128xf32>
    %27 = math.tanh %26 : vector<8x128xf32>
    %cst_17 = arith.constant 1.000000e+00 : f32
    %28 = vector.broadcast %cst_17 : f32 to vector<8x128xf32>
    %29 = arith.addf %27, %28 : vector<8x128xf32>
    %cst_18 = arith.constant 5.000000e-01 : f32
    %30 = vector.broadcast %cst_18 : f32 to vector<8x128xf32>
    %31 = arith.mulf %30, %29 : vector<8x128xf32>
    %32 = vector.extract_strided_slice %15 {offsets = [0, 256], sizes = [8, 128], strides = [1, 1]} : vector<8x512xf32> to vector<8x128xf32>
    %33 = math.tanh %32 : vector<8x128xf32>
    %34 = vector.extract_strided_slice %15 {offsets = [0, 384], sizes = [8, 128], strides = [1, 1]} : vector<8x512xf32> to vector<8x128xf32>
    %cst_19 = arith.constant 5.000000e-01 : f32
    %35 = vector.broadcast %cst_19 : f32 to vector<8x128xf32>
    %36 = arith.mulf %35, %34 : vector<8x128xf32>
    %37 = math.tanh %36 : vector<8x128xf32>
    %cst_20 = arith.constant 1.000000e+00 : f32
    %38 = vector.broadcast %cst_20 : f32 to vector<8x128xf32>
    %39 = arith.addf %37, %38 : vector<8x128xf32>
    %cst_21 = arith.constant 5.000000e-01 : f32
    %40 = vector.broadcast %cst_21 : f32 to vector<8x128xf32>
    %41 = arith.mulf %40, %39 : vector<8x128xf32>
    %42 = arith.mulf %31, %8 : vector<8x128xf32>
    %43 = arith.mulf %23, %33 : vector<8x128xf32>
    %44 = arith.addf %42, %43 : vector<8x128xf32>
    %45 = math.tanh %44 : vector<8x128xf32>
    %46 = arith.mulf %41, %45 : vector<8x128xf32>
    %c1_i32 = arith.constant 1 : i32
    %c8_i32_22 = arith.constant 8 : i32
    %47 = arith.muli %c1_i32, %c8_i32_22 : i32
    %48 = arith.index_cast %47 : i32 to index
    %c0_23 = arith.constant 0 : index
    %49 = vector.load %arg5[%48, %c0_23] : memref<64x512xf32, #tpu.memory_space<vmem>>, vector<8x512xf32>
    %50 = arith.truncf %46 : vector<8x128xf32> to vector<8x128xbf16>
    %c0_24 = arith.constant 0 : index
    %c0_25 = arith.constant 0 : index
    %51 = vector.load %arg2[%c0_24, %c0_25] : memref<128x512xbf16, #tpu.memory_space<vmem>>, vector<128x512xbf16>
    %cst_26 = arith.constant dense<0.000000e+00> : vector<8x512xf32>
    %52 = tpu.matmul %50, %51, %cst_26 {dimension_numbers = #tpu.dot_dimension_numbers<[1], [0], [0], [1], [0, 0, 1, 1], [], []>} : vector<8x128xbf16>, vector<128x512xbf16>, vector<8x512xf32> -> vector<8x512xf32>
    %53 = arith.addf %49, %52 : vector<8x512xf32>
    %54 = vector.extract_strided_slice %53 {offsets = [0, 0], sizes = [8, 128], strides = [1, 1]} : vector<8x512xf32> to vector<8x128xf32>
    %cst_27 = arith.constant 5.000000e-01 : f32
    %55 = vector.broadcast %cst_27 : f32 to vector<8x128xf32>
    %56 = arith.mulf %55, %54 : vector<8x128xf32>
    %57 = math.tanh %56 : vector<8x128xf32>
    %cst_28 = arith.constant 1.000000e+00 : f32
    %58 = vector.broadcast %cst_28 : f32 to vector<8x128xf32>
    %59 = arith.addf %57, %58 : vector<8x128xf32>
    %cst_29 = arith.constant 5.000000e-01 : f32
    %60 = vector.broadcast %cst_29 : f32 to vector<8x128xf32>
    %61 = arith.mulf %60, %59 : vector<8x128xf32>
    %62 = vector.extract_strided_slice %53 {offsets = [0, 128], sizes = [8, 128], strides = [1, 1]} : vector<8x512xf32> to vector<8x128xf32>
    %cst_30 = arith.constant 5.000000e-01 : f32
    %63 = vector.broadcast %cst_30 : f32 to vector<8x128xf32>
    %64 = arith.mulf %63, %62 : vector<8x128xf32>
    %65 = math.tanh %64 : vector<8x128xf32>
    %cst_31 = arith.constant 1.000000e+00 : f32
    %66 = vector.broadcast %cst_31 : f32 to vector<8x128xf32>
    %67 = arith.addf %65, %66 : vector<8x128xf32>
    %cst_32 = arith.constant 5.000000e-01 : f32
    %68 = vector.broadcast %cst_32 : f32 to vector<8x128xf32>
    %69 = arith.mulf %68, %67 : vector<8x128xf32>
    %70 = vector.extract_strided_slice %53 {offsets = [0, 256], sizes = [8, 128], strides = [1, 1]} : vector<8x512xf32> to vector<8x128xf32>
    %71 = math.tanh %70 : vector<8x128xf32>
    %72 = vector.extract_strided_slice %53 {offsets = [0, 384], sizes = [8, 128], strides = [1, 1]} : vector<8x512xf32> to vector<8x128xf32>
    %cst_33 = arith.constant 5.000000e-01 : f32
    %73 = vector.broadcast %cst_33 : f32 to vector<8x128xf32>
    %74 = arith.mulf %73, %72 : vector<8x128xf32>
    %75 = math.tanh %74 : vector<8x128xf32>
    %cst_34 = arith.constant 1.000000e+00 : f32
    %76 = vector.broadcast %cst_34 : f32 to vector<8x128xf32>
    %77 = arith.addf %75, %76 : vector<8x128xf32>
    %cst_35 = arith.constant 5.000000e-01 : f32
    %78 = vector.broadcast %cst_35 : f32 to vector<8x128xf32>
    %79 = arith.mulf %78, %77 : vector<8x128xf32>
    %80 = arith.mulf %69, %44 : vector<8x128xf32>
    %81 = arith.mulf %61, %71 : vector<8x128xf32>
    %82 = arith.addf %80, %81 : vector<8x128xf32>
    %83 = math.tanh %82 : vector<8x128xf32>
    %84 = arith.mulf %79, %83 : vector<8x128xf32>
    %c2_i32 = arith.constant 2 : i32
    %c8_i32_36 = arith.constant 8 : i32
    %85 = arith.muli %c2_i32, %c8_i32_36 : i32
    %86 = arith.index_cast %85 : i32 to index
    %c0_37 = arith.constant 0 : index
    %87 = vector.load %arg5[%86, %c0_37] : memref<64x512xf32, #tpu.memory_space<vmem>>, vector<8x512xf32>
    %88 = arith.truncf %84 : vector<8x128xf32> to vector<8x128xbf16>
    %c0_38 = arith.constant 0 : index
    %c0_39 = arith.constant 0 : index
    %89 = vector.load %arg2[%c0_38, %c0_39] : memref<128x512xbf16, #tpu.memory_space<vmem>>, vector<128x512xbf16>
    %cst_40 = arith.constant dense<0.000000e+00> : vector<8x512xf32>
    %90 = tpu.matmul %88, %89, %cst_40 {dimension_numbers = #tpu.dot_dimension_numbers<[1], [0], [0], [1], [0, 0, 1, 1], [], []>} : vector<8x128xbf16>, vector<128x512xbf16>, vector<8x512xf32> -> vector<8x512xf32>
    %91 = arith.addf %87, %90 : vector<8x512xf32>
    %92 = vector.extract_strided_slice %91 {offsets = [0, 0], sizes = [8, 128], strides = [1, 1]} : vector<8x512xf32> to vector<8x128xf32>
    %cst_41 = arith.constant 5.000000e-01 : f32
    %93 = vector.broadcast %cst_41 : f32 to vector<8x128xf32>
    %94 = arith.mulf %93, %92 : vector<8x128xf32>
    %95 = math.tanh %94 : vector<8x128xf32>
    %cst_42 = arith.constant 1.000000e+00 : f32
    %96 = vector.broadcast %cst_42 : f32 to vector<8x128xf32>
    %97 = arith.addf %95, %96 : vector<8x128xf32>
    %cst_43 = arith.constant 5.000000e-01 : f32
    %98 = vector.broadcast %cst_43 : f32 to vector<8x128xf32>
    %99 = arith.mulf %98, %97 : vector<8x128xf32>
    %100 = vector.extract_strided_slice %91 {offsets = [0, 128], sizes = [8, 128], strides = [1, 1]} : vector<8x512xf32> to vector<8x128xf32>
    %cst_44 = arith.constant 5.000000e-01 : f32
    %101 = vector.broadcast %cst_44 : f32 to vector<8x128xf32>
    %102 = arith.mulf %101, %100 : vector<8x128xf32>
    %103 = math.tanh %102 : vector<8x128xf32>
    %cst_45 = arith.constant 1.000000e+00 : f32
    %104 = vector.broadcast %cst_45 : f32 to vector<8x128xf32>
    %105 = arith.addf %103, %104 : vector<8x128xf32>
    %cst_46 = arith.constant 5.000000e-01 : f32
    %106 = vector.broadcast %cst_46 : f32 to vector<8x128xf32>
    %107 = arith.mulf %106, %105 : vector<8x128xf32>
    %108 = vector.extract_strided_slice %91 {offsets = [0, 256], sizes = [8, 128], strides = [1, 1]} : vector<8x512xf32> to vector<8x128xf32>
    %109 = math.tanh %108 : vector<8x128xf32>
    %110 = vector.extract_strided_slice %91 {offsets = [0, 384], sizes = [8, 128], strides = [1, 1]} : vector<8x512xf32> to vector<8x128xf32>
    %cst_47 = arith.constant 5.000000e-01 : f32
    %111 = vector.broadcast %cst_47 : f32 to vector<8x128xf32>
    %112 = arith.mulf %111, %110 : vector<8x128xf32>
    %113 = math.tanh %112 : vector<8x128xf32>
    %cst_48 = arith.constant 1.000000e+00 : f32
    %114 = vector.broadcast %cst_48 : f32 to vector<8x128xf32>
    %115 = arith.addf %113, %114 : vector<8x128xf32>
    %cst_49 = arith.constant 5.000000e-01 : f32
    %116 = vector.broadcast %cst_49 : f32 to vector<8x128xf32>
    %117 = arith.mulf %116, %115 : vector<8x128xf32>
    %118 = arith.mulf %107, %82 : vector<8x128xf32>
    %119 = arith.mulf %99, %109 : vector<8x128xf32>
    %120 = arith.addf %118, %119 : vector<8x128xf32>
    %121 = math.tanh %120 : vector<8x128xf32>
    %122 = arith.mulf %117, %121 : vector<8x128xf32>
    %c3_i32 = arith.constant 3 : i32
    %c8_i32_50 = arith.constant 8 : i32
    %123 = arith.muli %c3_i32, %c8_i32_50 : i32
    %124 = arith.index_cast %123 : i32 to index
    %c0_51 = arith.constant 0 : index
    %125 = vector.load %arg5[%124, %c0_51] : memref<64x512xf32, #tpu.memory_space<vmem>>, vector<8x512xf32>
    %126 = arith.truncf %122 : vector<8x128xf32> to vector<8x128xbf16>
    %c0_52 = arith.constant 0 : index
    %c0_53 = arith.constant 0 : index
    %127 = vector.load %arg2[%c0_52, %c0_53] : memref<128x512xbf16, #tpu.memory_space<vmem>>, vector<128x512xbf16>
    %cst_54 = arith.constant dense<0.000000e+00> : vector<8x512xf32>
    %128 = tpu.matmul %126, %127, %cst_54 {dimension_numbers = #tpu.dot_dimension_numbers<[1], [0], [0], [1], [0, 0, 1, 1], [], []>} : vector<8x128xbf16>, vector<128x512xbf16>, vector<8x512xf32> -> vector<8x512xf32>
    %129 = arith.addf %125, %128 : vector<8x512xf32>
    %130 = vector.extract_strided_slice %129 {offsets = [0, 0], sizes = [8, 128], strides = [1, 1]} : vector<8x512xf32> to vector<8x128xf32>
    %cst_55 = arith.constant 5.000000e-01 : f32
    %131 = vector.broadcast %cst_55 : f32 to vector<8x128xf32>
    %132 = arith.mulf %131, %130 : vector<8x128xf32>
    %133 = math.tanh %132 : vector<8x128xf32>
    %cst_56 = arith.constant 1.000000e+00 : f32
    %134 = vector.broadcast %cst_56 : f32 to vector<8x128xf32>
    %135 = arith.addf %133, %134 : vector<8x128xf32>
    %cst_57 = arith.constant 5.000000e-01 : f32
    %136 = vector.broadcast %cst_57 : f32 to vector<8x128xf32>
    %137 = arith.mulf %136, %135 : vector<8x128xf32>
    %138 = vector.extract_strided_slice %129 {offsets = [0, 128], sizes = [8, 128], strides = [1, 1]} : vector<8x512xf32> to vector<8x128xf32>
    %cst_58 = arith.constant 5.000000e-01 : f32
    %139 = vector.broadcast %cst_58 : f32 to vector<8x128xf32>
    %140 = arith.mulf %139, %138 : vector<8x128xf32>
    %141 = math.tanh %140 : vector<8x128xf32>
    %cst_59 = arith.constant 1.000000e+00 : f32
    %142 = vector.broadcast %cst_59 : f32 to vector<8x128xf32>
    %143 = arith.addf %141, %142 : vector<8x128xf32>
    %cst_60 = arith.constant 5.000000e-01 : f32
    %144 = vector.broadcast %cst_60 : f32 to vector<8x128xf32>
    %145 = arith.mulf %144, %143 : vector<8x128xf32>
    %146 = vector.extract_strided_slice %129 {offsets = [0, 256], sizes = [8, 128], strides = [1, 1]} : vector<8x512xf32> to vector<8x128xf32>
    %147 = math.tanh %146 : vector<8x128xf32>
    %148 = vector.extract_strided_slice %129 {offsets = [0, 384], sizes = [8, 128], strides = [1, 1]} : vector<8x512xf32> to vector<8x128xf32>
    %cst_61 = arith.constant 5.000000e-01 : f32
    %149 = vector.broadcast %cst_61 : f32 to vector<8x128xf32>
    %150 = arith.mulf %149, %148 : vector<8x128xf32>
    %151 = math.tanh %150 : vector<8x128xf32>
    %cst_62 = arith.constant 1.000000e+00 : f32
    %152 = vector.broadcast %cst_62 : f32 to vector<8x128xf32>
    %153 = arith.addf %151, %152 : vector<8x128xf32>
    %cst_63 = arith.constant 5.000000e-01 : f32
    %154 = vector.broadcast %cst_63 : f32 to vector<8x128xf32>
    %155 = arith.mulf %154, %153 : vector<8x128xf32>
    %156 = arith.mulf %145, %120 : vector<8x128xf32>
    %157 = arith.mulf %137, %147 : vector<8x128xf32>
    %158 = arith.addf %156, %157 : vector<8x128xf32>
    %159 = math.tanh %158 : vector<8x128xf32>
    %160 = arith.mulf %155, %159 : vector<8x128xf32>
    %c4_i32 = arith.constant 4 : i32
    %c8_i32_64 = arith.constant 8 : i32
    %161 = arith.muli %c4_i32, %c8_i32_64 : i32
    %162 = arith.index_cast %161 : i32 to index
    %c0_65 = arith.constant 0 : index
    %163 = vector.load %arg5[%162, %c0_65] : memref<64x512xf32, #tpu.memory_space<vmem>>, vector<8x512xf32>
    %164 = arith.truncf %160 : vector<8x128xf32> to vector<8x128xbf16>
    %c0_66 = arith.constant 0 : index
    %c0_67 = arith.constant 0 : index
    %165 = vector.load %arg2[%c0_66, %c0_67] : memref<128x512xbf16, #tpu.memory_space<vmem>>, vector<128x512xbf16>
    %cst_68 = arith.constant dense<0.000000e+00> : vector<8x512xf32>
    %166 = tpu.matmul %164, %165, %cst_68 {dimension_numbers = #tpu.dot_dimension_numbers<[1], [0], [0], [1], [0, 0, 1, 1], [], []>} : vector<8x128xbf16>, vector<128x512xbf16>, vector<8x512xf32> -> vector<8x512xf32>
    %167 = arith.addf %163, %166 : vector<8x512xf32>
    %168 = vector.extract_strided_slice %167 {offsets = [0, 0], sizes = [8, 128], strides = [1, 1]} : vector<8x512xf32> to vector<8x128xf32>
    %cst_69 = arith.constant 5.000000e-01 : f32
    %169 = vector.broadcast %cst_69 : f32 to vector<8x128xf32>
    %170 = arith.mulf %169, %168 : vector<8x128xf32>
    %171 = math.tanh %170 : vector<8x128xf32>
    %cst_70 = arith.constant 1.000000e+00 : f32
    %172 = vector.broadcast %cst_70 : f32 to vector<8x128xf32>
    %173 = arith.addf %171, %172 : vector<8x128xf32>
    %cst_71 = arith.constant 5.000000e-01 : f32
    %174 = vector.broadcast %cst_71 : f32 to vector<8x128xf32>
    %175 = arith.mulf %174, %173 : vector<8x128xf32>
    %176 = vector.extract_strided_slice %167 {offsets = [0, 128], sizes = [8, 128], strides = [1, 1]} : vector<8x512xf32> to vector<8x128xf32>
    %cst_72 = arith.constant 5.000000e-01 : f32
    %177 = vector.broadcast %cst_72 : f32 to vector<8x128xf32>
    %178 = arith.mulf %177, %176 : vector<8x128xf32>
    %179 = math.tanh %178 : vector<8x128xf32>
    %cst_73 = arith.constant 1.000000e+00 : f32
    %180 = vector.broadcast %cst_73 : f32 to vector<8x128xf32>
    %181 = arith.addf %179, %180 : vector<8x128xf32>
    %cst_74 = arith.constant 5.000000e-01 : f32
    %182 = vector.broadcast %cst_74 : f32 to vector<8x128xf32>
    %183 = arith.mulf %182, %181 : vector<8x128xf32>
    %184 = vector.extract_strided_slice %167 {offsets = [0, 256], sizes = [8, 128], strides = [1, 1]} : vector<8x512xf32> to vector<8x128xf32>
    %185 = math.tanh %184 : vector<8x128xf32>
    %186 = vector.extract_strided_slice %167 {offsets = [0, 384], sizes = [8, 128], strides = [1, 1]} : vector<8x512xf32> to vector<8x128xf32>
    %cst_75 = arith.constant 5.000000e-01 : f32
    %187 = vector.broadcast %cst_75 : f32 to vector<8x128xf32>
    %188 = arith.mulf %187, %186 : vector<8x128xf32>
    %189 = math.tanh %188 : vector<8x128xf32>
    %cst_76 = arith.constant 1.000000e+00 : f32
    %190 = vector.broadcast %cst_76 : f32 to vector<8x128xf32>
    %191 = arith.addf %189, %190 : vector<8x128xf32>
    %cst_77 = arith.constant 5.000000e-01 : f32
    %192 = vector.broadcast %cst_77 : f32 to vector<8x128xf32>
    %193 = arith.mulf %192, %191 : vector<8x128xf32>
    %194 = arith.mulf %183, %158 : vector<8x128xf32>
    %195 = arith.mulf %175, %185 : vector<8x128xf32>
    %196 = arith.addf %194, %195 : vector<8x128xf32>
    %197 = math.tanh %196 : vector<8x128xf32>
    %198 = arith.mulf %193, %197 : vector<8x128xf32>
    %c5_i32 = arith.constant 5 : i32
    %c8_i32_78 = arith.constant 8 : i32
    %199 = arith.muli %c5_i32, %c8_i32_78 : i32
    %200 = arith.index_cast %199 : i32 to index
    %c0_79 = arith.constant 0 : index
    %201 = vector.load %arg5[%200, %c0_79] : memref<64x512xf32, #tpu.memory_space<vmem>>, vector<8x512xf32>
    %202 = arith.truncf %198 : vector<8x128xf32> to vector<8x128xbf16>
    %c0_80 = arith.constant 0 : index
    %c0_81 = arith.constant 0 : index
    %203 = vector.load %arg2[%c0_80, %c0_81] : memref<128x512xbf16, #tpu.memory_space<vmem>>, vector<128x512xbf16>
    %cst_82 = arith.constant dense<0.000000e+00> : vector<8x512xf32>
    %204 = tpu.matmul %202, %203, %cst_82 {dimension_numbers = #tpu.dot_dimension_numbers<[1], [0], [0], [1], [0, 0, 1, 1], [], []>} : vector<8x128xbf16>, vector<128x512xbf16>, vector<8x512xf32> -> vector<8x512xf32>
    %205 = arith.addf %201, %204 : vector<8x512xf32>
    %206 = vector.extract_strided_slice %205 {offsets = [0, 0], sizes = [8, 128], strides = [1, 1]} : vector<8x512xf32> to vector<8x128xf32>
    %cst_83 = arith.constant 5.000000e-01 : f32
    %207 = vector.broadcast %cst_83 : f32 to vector<8x128xf32>
    %208 = arith.mulf %207, %206 : vector<8x128xf32>
    %209 = math.tanh %208 : vector<8x128xf32>
    %cst_84 = arith.constant 1.000000e+00 : f32
    %210 = vector.broadcast %cst_84 : f32 to vector<8x128xf32>
    %211 = arith.addf %209, %210 : vector<8x128xf32>
    %cst_85 = arith.constant 5.000000e-01 : f32
    %212 = vector.broadcast %cst_85 : f32 to vector<8x128xf32>
    %213 = arith.mulf %212, %211 : vector<8x128xf32>
    %214 = vector.extract_strided_slice %205 {offsets = [0, 128], sizes = [8, 128], strides = [1, 1]} : vector<8x512xf32> to vector<8x128xf32>
    %cst_86 = arith.constant 5.000000e-01 : f32
    %215 = vector.broadcast %cst_86 : f32 to vector<8x128xf32>
    %216 = arith.mulf %215, %214 : vector<8x128xf32>
    %217 = math.tanh %216 : vector<8x128xf32>
    %cst_87 = arith.constant 1.000000e+00 : f32
    %218 = vector.broadcast %cst_87 : f32 to vector<8x128xf32>
    %219 = arith.addf %217, %218 : vector<8x128xf32>
    %cst_88 = arith.constant 5.000000e-01 : f32
    %220 = vector.broadcast %cst_88 : f32 to vector<8x128xf32>
    %221 = arith.mulf %220, %219 : vector<8x128xf32>
    %222 = vector.extract_strided_slice %205 {offsets = [0, 256], sizes = [8, 128], strides = [1, 1]} : vector<8x512xf32> to vector<8x128xf32>
    %223 = math.tanh %222 : vector<8x128xf32>
    %224 = vector.extract_strided_slice %205 {offsets = [0, 384], sizes = [8, 128], strides = [1, 1]} : vector<8x512xf32> to vector<8x128xf32>
    %cst_89 = arith.constant 5.000000e-01 : f32
    %225 = vector.broadcast %cst_89 : f32 to vector<8x128xf32>
    %226 = arith.mulf %225, %224 : vector<8x128xf32>
    %227 = math.tanh %226 : vector<8x128xf32>
    %cst_90 = arith.constant 1.000000e+00 : f32
    %228 = vector.broadcast %cst_90 : f32 to vector<8x128xf32>
    %229 = arith.addf %227, %228 : vector<8x128xf32>
    %cst_91 = arith.constant 5.000000e-01 : f32
    %230 = vector.broadcast %cst_91 : f32 to vector<8x128xf32>
    %231 = arith.mulf %230, %229 : vector<8x128xf32>
    %232 = arith.mulf %221, %196 : vector<8x128xf32>
    %233 = arith.mulf %213, %223 : vector<8x128xf32>
    %234 = arith.addf %232, %233 : vector<8x128xf32>
    %235 = math.tanh %234 : vector<8x128xf32>
    %236 = arith.mulf %231, %235 : vector<8x128xf32>
    %c6_i32 = arith.constant 6 : i32
    %c8_i32_92 = arith.constant 8 : i32
    %237 = arith.muli %c6_i32, %c8_i32_92 : i32
    %238 = arith.index_cast %237 : i32 to index
    %c0_93 = arith.constant 0 : index
    %239 = vector.load %arg5[%238, %c0_93] : memref<64x512xf32, #tpu.memory_space<vmem>>, vector<8x512xf32>
    %240 = arith.truncf %236 : vector<8x128xf32> to vector<8x128xbf16>
    %c0_94 = arith.constant 0 : index
    %c0_95 = arith.constant 0 : index
    %241 = vector.load %arg2[%c0_94, %c0_95] : memref<128x512xbf16, #tpu.memory_space<vmem>>, vector<128x512xbf16>
    %cst_96 = arith.constant dense<0.000000e+00> : vector<8x512xf32>
    %242 = tpu.matmul %240, %241, %cst_96 {dimension_numbers = #tpu.dot_dimension_numbers<[1], [0], [0], [1], [0, 0, 1, 1], [], []>} : vector<8x128xbf16>, vector<128x512xbf16>, vector<8x512xf32> -> vector<8x512xf32>
    %243 = arith.addf %239, %242 : vector<8x512xf32>
    %244 = vector.extract_strided_slice %243 {offsets = [0, 0], sizes = [8, 128], strides = [1, 1]} : vector<8x512xf32> to vector<8x128xf32>
    %cst_97 = arith.constant 5.000000e-01 : f32
    %245 = vector.broadcast %cst_97 : f32 to vector<8x128xf32>
    %246 = arith.mulf %245, %244 : vector<8x128xf32>
    %247 = math.tanh %246 : vector<8x128xf32>
    %cst_98 = arith.constant 1.000000e+00 : f32
    %248 = vector.broadcast %cst_98 : f32 to vector<8x128xf32>
    %249 = arith.addf %247, %248 : vector<8x128xf32>
    %cst_99 = arith.constant 5.000000e-01 : f32
    %250 = vector.broadcast %cst_99 : f32 to vector<8x128xf32>
    %251 = arith.mulf %250, %249 : vector<8x128xf32>
    %252 = vector.extract_strided_slice %243 {offsets = [0, 128], sizes = [8, 128], strides = [1, 1]} : vector<8x512xf32> to vector<8x128xf32>
    %cst_100 = arith.constant 5.000000e-01 : f32
    %253 = vector.broadcast %cst_100 : f32 to vector<8x128xf32>
    %254 = arith.mulf %253, %252 : vector<8x128xf32>
    %255 = math.tanh %254 : vector<8x128xf32>
    %cst_101 = arith.constant 1.000000e+00 : f32
    %256 = vector.broadcast %cst_101 : f32 to vector<8x128xf32>
    %257 = arith.addf %255, %256 : vector<8x128xf32>
    %cst_102 = arith.constant 5.000000e-01 : f32
    %258 = vector.broadcast %cst_102 : f32 to vector<8x128xf32>
    %259 = arith.mulf %258, %257 : vector<8x128xf32>
    %260 = vector.extract_strided_slice %243 {offsets = [0, 256], sizes = [8, 128], strides = [1, 1]} : vector<8x512xf32> to vector<8x128xf32>
    %261 = math.tanh %260 : vector<8x128xf32>
    %262 = vector.extract_strided_slice %243 {offsets = [0, 384], sizes = [8, 128], strides = [1, 1]} : vector<8x512xf32> to vector<8x128xf32>
    %cst_103 = arith.constant 5.000000e-01 : f32
    %263 = vector.broadcast %cst_103 : f32 to vector<8x128xf32>
    %264 = arith.mulf %263, %262 : vector<8x128xf32>
    %265 = math.tanh %264 : vector<8x128xf32>
    %cst_104 = arith.constant 1.000000e+00 : f32
    %266 = vector.broadcast %cst_104 : f32 to vector<8x128xf32>
    %267 = arith.addf %265, %266 : vector<8x128xf32>
    %cst_105 = arith.constant 5.000000e-01 : f32
    %268 = vector.broadcast %cst_105 : f32 to vector<8x128xf32>
    %269 = arith.mulf %268, %267 : vector<8x128xf32>
    %270 = arith.mulf %259, %234 : vector<8x128xf32>
    %271 = arith.mulf %251, %261 : vector<8x128xf32>
    %272 = arith.addf %270, %271 : vector<8x128xf32>
    %273 = math.tanh %272 : vector<8x128xf32>
    %274 = arith.mulf %269, %273 : vector<8x128xf32>
    %c7_i32 = arith.constant 7 : i32
    %c8_i32_106 = arith.constant 8 : i32
    %275 = arith.muli %c7_i32, %c8_i32_106 : i32
    %276 = arith.index_cast %275 : i32 to index
    %c0_107 = arith.constant 0 : index
    %277 = vector.load %arg5[%276, %c0_107] : memref<64x512xf32, #tpu.memory_space<vmem>>, vector<8x512xf32>
    %278 = arith.truncf %274 : vector<8x128xf32> to vector<8x128xbf16>
    %c0_108 = arith.constant 0 : index
    %c0_109 = arith.constant 0 : index
    %279 = vector.load %arg2[%c0_108, %c0_109] : memref<128x512xbf16, #tpu.memory_space<vmem>>, vector<128x512xbf16>
    %cst_110 = arith.constant dense<0.000000e+00> : vector<8x512xf32>
    %280 = tpu.matmul %278, %279, %cst_110 {dimension_numbers = #tpu.dot_dimension_numbers<[1], [0], [0], [1], [0, 0, 1, 1], [], []>} : vector<8x128xbf16>, vector<128x512xbf16>, vector<8x512xf32> -> vector<8x512xf32>
    %281 = arith.addf %277, %280 : vector<8x512xf32>
    %282 = vector.extract_strided_slice %281 {offsets = [0, 0], sizes = [8, 128], strides = [1, 1]} : vector<8x512xf32> to vector<8x128xf32>
    %cst_111 = arith.constant 5.000000e-01 : f32
    %283 = vector.broadcast %cst_111 : f32 to vector<8x128xf32>
    %284 = arith.mulf %283, %282 : vector<8x128xf32>
    %285 = math.tanh %284 : vector<8x128xf32>
    %cst_112 = arith.constant 1.000000e+00 : f32
    %286 = vector.broadcast %cst_112 : f32 to vector<8x128xf32>
    %287 = arith.addf %285, %286 : vector<8x128xf32>
    %cst_113 = arith.constant 5.000000e-01 : f32
    %288 = vector.broadcast %cst_113 : f32 to vector<8x128xf32>
    %289 = arith.mulf %288, %287 : vector<8x128xf32>
    %290 = vector.extract_strided_slice %281 {offsets = [0, 128], sizes = [8, 128], strides = [1, 1]} : vector<8x512xf32> to vector<8x128xf32>
    %cst_114 = arith.constant 5.000000e-01 : f32
    %291 = vector.broadcast %cst_114 : f32 to vector<8x128xf32>
    %292 = arith.mulf %291, %290 : vector<8x128xf32>
    %293 = math.tanh %292 : vector<8x128xf32>
    %cst_115 = arith.constant 1.000000e+00 : f32
    %294 = vector.broadcast %cst_115 : f32 to vector<8x128xf32>
    %295 = arith.addf %293, %294 : vector<8x128xf32>
    %cst_116 = arith.constant 5.000000e-01 : f32
    %296 = vector.broadcast %cst_116 : f32 to vector<8x128xf32>
    %297 = arith.mulf %296, %295 : vector<8x128xf32>
    %298 = vector.extract_strided_slice %281 {offsets = [0, 256], sizes = [8, 128], strides = [1, 1]} : vector<8x512xf32> to vector<8x128xf32>
    %299 = math.tanh %298 : vector<8x128xf32>
    %300 = vector.extract_strided_slice %281 {offsets = [0, 384], sizes = [8, 128], strides = [1, 1]} : vector<8x512xf32> to vector<8x128xf32>
    %cst_117 = arith.constant 5.000000e-01 : f32
    %301 = vector.broadcast %cst_117 : f32 to vector<8x128xf32>
    %302 = arith.mulf %301, %300 : vector<8x128xf32>
    %303 = math.tanh %302 : vector<8x128xf32>
    %cst_118 = arith.constant 1.000000e+00 : f32
    %304 = vector.broadcast %cst_118 : f32 to vector<8x128xf32>
    %305 = arith.addf %303, %304 : vector<8x128xf32>
    %cst_119 = arith.constant 5.000000e-01 : f32
    %306 = vector.broadcast %cst_119 : f32 to vector<8x128xf32>
    %307 = arith.mulf %306, %305 : vector<8x128xf32>
    %308 = arith.mulf %297, %272 : vector<8x128xf32>
    %309 = arith.mulf %289, %299 : vector<8x128xf32>
    %310 = arith.addf %308, %309 : vector<8x128xf32>
    %311 = math.tanh %310 : vector<8x128xf32>
    %312 = arith.mulf %307, %311 : vector<8x128xf32>
    %c8_i32_120 = arith.constant 8 : i32
    %c0_121 = arith.constant 0 : index
    %c0_122 = arith.constant 0 : index
    %313 = vector.load %arg4[%c0_121, %c0_122] : memref<8x128xf32, #tpu.memory_space<vmem>>, vector<8x128xf32>
    tpu.vector_store %arg4[%c0_121, %c0_122], %312 {strides = array<i32>} : memref<8x128xf32, #tpu.memory_space<vmem>>, vector<8x128xf32>,
    return
  }
}

</mosaic_0001>

<llo_original>
// kernel: tpu_custom_call.1
$region0: #{tpu_custom_call.1}
  #allocation0 [shape = 'u32[]', space=smem, size = 0x4, offset = 0x4, fixed_abs, tag = 'smem constant byte address 0x4 - core index']
  #allocation1 [shape = 'u32[144,128]{1,0:T(1,128)}', space=vmem, size = 0x12000, scoped, tag = 'internal scratch']
  #allocation2 [shape = 'f32[64,512]{1,0:T(8,128)}', space=vmem, size = 0x20000, scoped, tag = 'scratch operand']
  %s0 = inlined_call_operand.vmem [shape: bf16[64,32], index: 0, kind: input, shape index: {}]
  %s1 = inlined_call_operand.hbm [shape: bf16[32,512], index: 1, kind: input, shape index: {}]
  %s2 = inlined_call_operand.hbm [shape: bf16[128,512], index: 2, kind: input, shape index: {}]
  %s3 = inlined_call_operand.vmem [shape: f32[1,512], index: 3, kind: input, shape index: {}]
  %s4 = inlined_call_operand.hbm [shape: f32[8,128], index: 4, kind: output, shape index: {}]
  %s5 = sld [smem:[#allocation0]]
  $region34: #{tpu_custom_call.1} parent=0
    _
  %s7 = ssub.s32 1, %s5
  %s8 = scalar_select 0, %s7, %s5
  $region1: #{tpu_custom_call.1} parent=0
    #allocation3 [shape = 'u8[32768]{0}', space=vmem, size = 0x8000, scoped, tag = 'input window, operand 1, single buffered']
    #allocation4 [shape = 's32[1]{0}', space=sflag, size = 0x4, scoped, tag = 'scoped memory for tpu_custom_call.1']
    #allocation5 [shape = 's32[1]{0}', space=sflag, size = 0x4, scoped, tag = 'scoped memory for tpu_custom_call.1']
    #allocation6 [shape = 'u8[131072]{0}', space=vmem, size = 0x20000, scoped, tag = 'input window, operand 2, single buffered']
    #allocation7 [shape = 's32[1]{0}', space=sflag, size = 0x4, scoped, tag = 'scoped memory for tpu_custom_call.1']
    #allocation8 [shape = 'u8[4096]{0}', space=vmem, size = 0x1000, scoped, tag = 'output window, operand 0, single buffered']
    %9 = vsyncpa [#allocation4], 0
    %10 = vsyncpa [#allocation7], 0
    %11 = vsyncpa [#allocation5], 0
    // Predicated region
    $region2: #{tpu_custom_call.1} parent=1 // pred_check
      _
    $region3: #{tpu_custom_call.1} parent=1 // pred_check_branch
      %13 = sbr.rel (0) target = $region5
    $region4: #{tpu_custom_call.1} parent=1 // pred_region
      _
    $region5: #{tpu_custom_call.1} parent=1 // pred_fallthru
      _
    // Predicated region
    $region6: #{tpu_custom_call.1} parent=1 // pred_check
      _
    $region7: #{tpu_custom_call.1} parent=1 // pred_check_branch
      %15 = sbr.rel (0) target = $region9
    $region8: #{tpu_custom_call.1} parent=1 // pred_region
      %s17 = ssub.s32 1024, 1024
      %18 = vsyncadd [#allocation4], %s17
      %s19 = sshll.u32 [#allocation3], 4
      %s20 = int_to_ptr.vmem [resolvable:$true] %s19
      %25 = dma.hbm_to_vmem [thread:$0]  %s1, 1024, %s20, [#allocation4], 256, 256, 16
    $region9: #{tpu_custom_call.1} parent=1 // pred_fallthru
      _
    // Predicated region
    $region10: #{tpu_custom_call.1} parent=1 // pred_check
      _
    $region11: #{tpu_custom_call.1} parent=1 // pred_check_branch
      %27 = sbr.rel (0) target = $region13
    $region12: #{tpu_custom_call.1} parent=1 // pred_region
      %s29 = ssub.s32 4096, 4096
      %30 = vsyncadd [#allocation7], %s29
      %s31 = sshll.u32 [#allocation6], 4
      %s32 = int_to_ptr.vmem [resolvable:$true] %s31
      %37 = dma.hbm_to_vmem [thread:$0]  %s2, 4096, %s32, [#allocation7], 256, 256, 16
    $region13: #{tpu_custom_call.1} parent=1 // pred_fallthru
      _
    // Predicated region
    $region14: #{tpu_custom_call.1} parent=1 // pred_check
      _
    $region15: #{tpu_custom_call.1} parent=1 // pred_check_branch
      %39 = sbr.rel (0) target = $region17
    $region16: #{tpu_custom_call.1} parent=1 // pred_region
      _
    $region17: #{tpu_custom_call.1} parent=1 // pred_fallthru
      _
    // Predicated region
    $region18: #{tpu_custom_call.1} parent=1 // pred_check
      _
    $region19: #{tpu_custom_call.1} parent=1 // pred_check_branch
      %41 = sbr.rel (0) target = $region21
    $region20: #{tpu_custom_call.1} parent=1 // pred_region
      %42 = dma.done [#allocation4], 1024
    $region21: #{tpu_custom_call.1} parent=1 // pred_fallthru
      _
    // Predicated region
    $region22: #{tpu_custom_call.1} parent=1 // pred_check
      _
    $region23: #{tpu_custom_call.1} parent=1 // pred_check_branch
      %44 = sbr.rel (0) target = $region25
    $region24: #{tpu_custom_call.1} parent=1 // pred_region
      %45 = dma.done [#allocation7], 4096
    $region25: #{tpu_custom_call.1} parent=1 // pred_fallthru
      _
    %v47 = vld [vmem:[%s0] sm:$0xf]
    %v48 = vld [vmem:[%s0 + $0x4] sm:$0xf]
    %v49 = vld [vmem:[%s0 + $0x8] sm:$0xf]
    %v50 = vld [vmem:[%s0 + $0xc] sm:$0xf]
    %v51 = vld [vmem:[%s0 + $0x10] sm:$0xf]
    %v52 = vld [vmem:[%s0 + $0x14] sm:$0xf]
    %v53 = vld [vmem:[%s0 + $0x18] sm:$0xf]
    %v54 = vld [vmem:[%s0 + $0x1c] sm:$0xf]
    %v55 = vld [vmem:[#allocation3] sm:$0xff]
    %v56 = vld [vmem:[#allocation3 + $0x8] sm:$0xff]
    %v57 = vld [vmem:[#allocation3 + $0x10] sm:$0xff]
    %v58 = vld [vmem:[#allocation3 + $0x18] sm:$0xff]
    %v59 = vld [vmem:[#allocation3 + $0x20] sm:$0xff]
    %v60 = vld [vmem:[#allocation3 + $0x28] sm:$0xff]
    %v61 = vld [vmem:[#allocation3 + $0x30] sm:$0xff]
    %v62 = vld [vmem:[#allocation3 + $0x38] sm:$0xff]
    %v63 = vld [vmem:[%s3] sm:$0xf]
    %v65 = vlaneseq
    %v66 = vshrl.u32 %v65, 7
    %v67 = vsub.s32 0, %v66
    %v68 = vrot.slane %v63, %v67
    %v69 = vlaneseq
    %v70 = vshrl.u32 %v69, 7
    %v71 = vsub.s32 1, %v70
    %v72 = vrot.slane %v63, %v71
    %v73 = vlaneseq
    %v74 = vshrl.u32 %v73, 7
    %v75 = vsub.s32 2, %v74
    %v76 = vrot.slane %v63, %v75
    %v77 = vlaneseq
    %v78 = vshrl.u32 %v77, 7
    %v79 = vsub.s32 3, %v78
    %v80 = vrot.slane %v63, %v79
    %v93 = vunpack.c.l.b16 %v47
    %v94 = vunpack.c.l.b16 %v48
    %v95 = vunpack.c.l.b16 %v49
    %v96 = vunpack.c.l.b16 %v50
    %v97 = vunpack.c.l.b16 %v51
    %v98 = vunpack.c.l.b16 %v52
    %v99 = vunpack.c.l.b16 %v53
    %v100 = vunpack.c.l.b16 %v54
    %v101 = vpack.c.b16 %v94, %v93
    %v102 = vpack.c.b16 %v96, %v95
    %v103 = vpack.c.b16 %v98, %v97
    %v104 = vpack.c.b16 %v100, %v99
    %v113 = vunpack.c.l.b16 %v55
    %v114 = vunpack.c.h.b16 %v55
    %v115 = vunpack.c.l.b16 %v56
    %v116 = vunpack.c.h.b16 %v56
    %v117 = vunpack.c.l.b16 %v57
    %v118 = vunpack.c.h.b16 %v57
    %v119 = vunpack.c.l.b16 %v58
    %v120 = vunpack.c.h.b16 %v58
    %v121 = vunpack.c.l.b16 %v59
    %v122 = vunpack.c.h.b16 %v59
    %v123 = vunpack.c.l.b16 %v60
    %v124 = vunpack.c.h.b16 %v60
    %v125 = vunpack.c.l.b16 %v61
    %v126 = vunpack.c.h.b16 %v61
    %v127 = vunpack.c.l.b16 %v62
    %v128 = vunpack.c.h.b16 %v62
    %v129 = vpack.c.b16 %v117, %v113
    %v130 = vpack.c.b16 %v118, %v114
    %v131 = vpack.c.b16 %v119, %v115
    %v132 = vpack.c.b16 %v120, %v116
    %v133 = vpack.c.b16 %v125, %v121
    %v134 = vpack.c.b16 %v126, %v122
    %v135 = vpack.c.b16 %v127, %v123
    %v136 = vpack.c.b16 %v128, %v124
    %vm145 = vcmask 261120
    %v147 = vsel %vm145, %v101, 0
    %v150 = vsel %vm145, %v102, 0
    %v153 = vsel %vm145, %v103, 0
    %v156 = vsel %vm145, %v104, 0
    %158 = vmatprep.subr.bf16.mxu0 0
    %159 = vmatpush1.bf16.msra.mxu0 0
    %160 = vmatprep.subr.bf16.mxu0 0
    %161 = vmatpush1.bf16.msra.mxu0 0
    %162 = vmatprep.subr.bf16.mxu0 0
    %163 = vmatpush1.bf16.msra.mxu0 0
    %164 = vmatprep.subr.bf16.mxu0 0
    %165 = vmatpush1.bf16.msra.mxu0 0
    %166 = vmatprep.subr.bf16.mxu0 0
    %167 = vmatpush1.bf16.msra.mxu0 0
    %168 = vmatprep.subr.bf16.mxu0 0
    %169 = vmatpush1.bf16.msra.mxu0 0
    %170 = vmatprep.subr.bf16.mxu0 %v134
    %171 = vmatpush1.bf16.msra.mxu0 %v133
    %172 = vmatprep.subr.bf16.mxu0 %v130
    %173 = vmatpush1.bf16.msra.mxu0 %v129
    %174 = vmatprep.subr.bf16.mxu0 0
    %175 = vmatpush2.bf16.msra.mxu0 0
    %176 = vmatprep.subr.bf16.mxu0 0
    %177 = vmatpush2.bf16.msra.mxu0 0
    %178 = vmatprep.subr.bf16.mxu0 0
    %179 = vmatpush2.bf16.msra.mxu0 0
    %180 = vmatprep.subr.bf16.mxu0 0
    %181 = vmatpush2.bf16.msra.mxu0 0
    %182 = vmatprep.subr.bf16.mxu0 0
    %183 = vmatpush2.bf16.msra.mxu0 0
    %184 = vmatprep.subr.bf16.mxu0 0
    %185 = vmatpush2.bf16.msra.mxu0 0
    %186 = vmatprep.subr.bf16.mxu0 0
    %187 = vmatpush2.bf16.msra.mxu0 0
    %188 = vmatprep.subr.bf16.mxu0 0
    %189 = vmatpush2.bf16.msra.mxu0 0
    %190 = vmatprep.mubr.bf16.mxu0 0
    %191 = vmatmul.mubr.bf16.gmra.mxu0 %v147
    %v192 = vpop.f32.mrf.mxu0
    %v193 = vadd.f32 %v68, %v192
    %v194 = vpop.f32.mrf.mxu0
    %v195 = vadd.f32 %v72, %v194
    %v196 = vpop.f32.mrf.mxu0
    %v197 = vadd.f32 %v68, %v196
    %v198 = vpop.f32.mrf.mxu0
    %v199 = vadd.f32 %v72, %v198
    %200 = vmatprep.mubr.bf16.mxu0 0
    %201 = vmatmul.mubr.bf16.gmra.mxu0 %v150
    %v202 = vpop.f32.mrf.mxu0
    %v203 = vadd.f32 %v68, %v202
    %v204 = vpop.f32.mrf.mxu0
    %v205 = vadd.f32 %v72, %v204
    %v206 = vpop.f32.mrf.mxu0
    %v207 = vadd.f32 %v68, %v206
    %v208 = vpop.f32.mrf.mxu0
    %v209 = vadd.f32 %v72, %v208
    %210 = vmatprep.mubr.bf16.mxu0 0
    %211 = vmatmul.mubr.bf16.gmra.mxu0 %v153
    %v212 = vpop.f32.mrf.mxu0
    %v213 = vadd.f32 %v68, %v212
    %v214 = vpop.f32.mrf.mxu0
    %v215 = vadd.f32 %v72, %v214
    %v216 = vpop.f32.mrf.mxu0
    %v217 = vadd.f32 %v68, %v216
    %v218 = vpop.f32.mrf.mxu0
    %v219 = vadd.f32 %v72, %v218
    %220 = vmatprep.mubr.bf16.mxu0 0
    %221 = vmatmul.mubr.bf16.gmra.mxu0 %v156
    %v222 = vpop.f32.mrf.mxu0
    %v223 = vadd.f32 %v68, %v222
    %v224 = vpop.f32.mrf.mxu0
    %v225 = vadd.f32 %v72, %v224
    %v226 = vpop.f32.mrf.mxu0
    %v227 = vadd.f32 %v68, %v226
    %v228 = vpop.f32.mrf.mxu0
    %v229 = vadd.f32 %v72, %v228
    %230 = vdwg.mxu0
    %231 = vmatprep.subr.bf16.mxu0 0
    %232 = vmatpush1.bf16.msra.mxu0 0
    %233 = vmatprep.subr.bf16.mxu0 0
    %234 = vmatpush1.bf16.msra.mxu0 0
    %235 = vmatprep.subr.bf16.mxu0 0
    %236 = vmatpush1.bf16.msra.mxu0 0
    %237 = vmatprep.subr.bf16.mxu0 0
    %238 = vmatpush1.bf16.msra.mxu0 0
    %239 = vmatprep.subr.bf16.mxu0 0
    %240 = vmatpush1.bf16.msra.mxu0 0
    %241 = vmatprep.subr.bf16.mxu0 0
    %242 = vmatpush1.bf16.msra.mxu0 0
    %243 = vmatprep.subr.bf16.mxu0 %v136
    %244 = vmatpush1.bf16.msra.mxu0 %v135
    %245 = vmatprep.subr.bf16.mxu0 %v132
    %246 = vmatpush1.bf16.msra.mxu0 %v131
    %247 = vmatprep.subr.bf16.mxu0 0
    %248 = vmatpush2.bf16.msra.mxu0 0
    %249 = vmatprep.subr.bf16.mxu0 0
    %250 = vmatpush2.bf16.msra.mxu0 0
    %251 = vmatprep.subr.bf16.mxu0 0
    %252 = vmatpush2.bf16.msra.mxu0 0
    %253 = vmatprep.subr.bf16.mxu0 0
    %254 = vmatpush2.bf16.msra.mxu0 0
    %255 = vmatprep.subr.bf16.mxu0 0
    %256 = vmatpush2.bf16.msra.mxu0 0
    %257 = vmatprep.subr.bf16.mxu0 0
    %258 = vmatpush2.bf16.msra.mxu0 0
    %259 = vmatprep.subr.bf16.mxu0 0
    %260 = vmatpush2.bf16.msra.mxu0 0
    %261 = vmatprep.subr.bf16.mxu0 0
    %262 = vmatpush2.bf16.msra.mxu0 0
    %263 = vmatprep.mubr.bf16.mxu0 0
    %264 = vmatmul.mubr.bf16.gmra.mxu0 %v147
    %v265 = vpop.f32.mrf.mxu0
    %v266 = vadd.f32 %v76, %v265
    %v267 = vpop.f32.mrf.mxu0
    %v268 = vadd.f32 %v80, %v267
    %v269 = vpop.f32.mrf.mxu0
    %v270 = vadd.f32 %v76, %v269
    %v271 = vpop.f32.mrf.mxu0
    %v272 = vadd.f32 %v80, %v271
    %273 = vmatprep.mubr.bf16.mxu0 0
    %274 = vmatmul.mubr.bf16.gmra.mxu0 %v150
    %v275 = vpop.f32.mrf.mxu0
    %v276 = vadd.f32 %v76, %v275
    %v277 = vpop.f32.mrf.mxu0
    %v278 = vadd.f32 %v80, %v277
    %v279 = vpop.f32.mrf.mxu0
    %v280 = vadd.f32 %v76, %v279
    %v281 = vpop.f32.mrf.mxu0
    %v282 = vadd.f32 %v80, %v281
    %283 = vmatprep.mubr.bf16.mxu0 0
    %284 = vmatmul.mubr.bf16.gmra.mxu0 %v153
    %v285 = vpop.f32.mrf.mxu0
    %v286 = vadd.f32 %v76, %v285
    %v287 = vpop.f32.mrf.mxu0
    %v288 = vadd.f32 %v80, %v287
    %v289 = vpop.f32.mrf.mxu0
    %v290 = vadd.f32 %v76, %v289
    %v291 = vpop.f32.mrf.mxu0
    %v292 = vadd.f32 %v80, %v291
    %293 = vmatprep.mubr.bf16.mxu0 0
    %294 = vmatmul.mubr.bf16.gmra.mxu0 %v156
    %v295 = vpop.f32.mrf.mxu0
    %v296 = vadd.f32 %v76, %v295
    %v297 = vpop.f32.mrf.mxu0
    %v298 = vadd.f32 %v80, %v297
    %v299 = vpop.f32.mrf.mxu0
    %v300 = vadd.f32 %v76, %v299
    %v301 = vpop.f32.mrf.mxu0
    %v302 = vadd.f32 %v80, %v301
    %303 = vdwg.mxu0
    %304 = vst [vmem:[#allocation2] sm:$0xff] %v193
    %305 = vst [vmem:[#allocation2 + $0x8] sm:$0xff] %v195
    %306 = vst [vmem:[#allocation2 + $0x10] sm:$0xff] %v266
    %307 = vst [vmem:[#allocation2 + $0x18] sm:$0xff] %v268
    %308 = vst [vmem:[#allocation2 + $0x20] sm:$0xff] %v197
    %309 = vst [vmem:[#allocation2 + $0x28] sm:$0xff] %v199
    %310 = vst [vmem:[#allocation2 + $0x30] sm:$0xff] %v270
    %311 = vst [vmem:[#allocation2 + $0x38] sm:$0xff] %v272
    %312 = vst [vmem:[#allocation2 + $0x40] sm:$0xff] %v203
    %313 = vst [vmem:[#allocation2 + $0x48] sm:$0xff] %v205
    %314 = vst [vmem:[#allocation2 + $0x50] sm:$0xff] %v276
    %315 = vst [vmem:[#allocation2 + $0x58] sm:$0xff] %v278
    %316 = vst [vmem:[#allocation2 + $0x60] sm:$0xff] %v207
    %317 = vst [vmem:[#allocation2 + $0x68] sm:$0xff] %v209
    %318 = vst [vmem:[#allocation2 + $0x70] sm:$0xff] %v280
    %319 = vst [vmem:[#allocation2 + $0x78] sm:$0xff] %v282
    %320 = vst [vmem:[#allocation2 + $0x80] sm:$0xff] %v213
    %321 = vst [vmem:[#allocation2 + $0x88] sm:$0xff] %v215
    %322 = vst [vmem:[#allocation2 + $0x90] sm:$0xff] %v286
    %323 = vst [vmem:[#allocation2 + $0x98] sm:$0xff] %v288
    %324 = vst [vmem:[#allocation2 + $0xa0] sm:$0xff] %v217
    %325 = vst [vmem:[#allocation2 + $0xa8] sm:$0xff] %v219
    %326 = vst [vmem:[#allocation2 + $0xb0] sm:$0xff] %v290
    %327 = vst [vmem:[#allocation2 + $0xb8] sm:$0xff] %v292
    %328 = vst [vmem:[#allocation2 + $0xc0] sm:$0xff] %v223
    %329 = vst [vmem:[#allocation2 + $0xc8] sm:$0xff] %v225
    %330 = vst [vmem:[#allocation2 + $0xd0] sm:$0xff] %v296
    %331 = vst [vmem:[#allocation2 + $0xd8] sm:$0xff] %v298
    %332 = vst [vmem:[#allocation2 + $0xe0] sm:$0xff] %v227
    %333 = vst [vmem:[#allocation2 + $0xe8] sm:$0xff] %v229
    %334 = vst [vmem:[#allocation2 + $0xf0] sm:$0xff] %v300
    %335 = vst [vmem:[#allocation2 + $0xf8] sm:$0xff] %v302
    %v336 = vld [vmem:[#allocation2] sm:$0xff]
    %v337 = vld [vmem:[#allocation2 + $0x8] sm:$0xff]
    %v338 = vld [vmem:[#allocation2 + $0x10] sm:$0xff]
    %v339 = vld [vmem:[#allocation2 + $0x18] sm:$0xff]
    %v340 = vld [vmem:[#allocation6] sm:$0xff]
    %v341 = vld [vmem:[#allocation6 + $0x8] sm:$0xff]
    %v342 = vld [vmem:[#allocation6 + $0x10] sm:$0xff]
    %v343 = vld [vmem:[#allocation6 + $0x18] sm:$0xff]
    %v344 = vld [vmem:[#allocation6 + $0x20] sm:$0xff]
    %v345 = vld [vmem:[#allocation6 + $0x28] sm:$0xff]
    %v346 = vld [vmem:[#allocation6 + $0x30] sm:$0xff]
    %v347 = vld [vmem:[#allocation6 + $0x38] sm:$0xff]
    %v348 = vld [vmem:[#allocation6 + $0x40] sm:$0xff]
    %v349 = vld [vmem:[#allocation6 + $0x48] sm:$0xff]
    %v350 = vld [vmem:[#allocation6 + $0x50] sm:$0xff]
    %v351 = vld [vmem:[#allocation6 + $0x58] sm:$0xff]
    %v352 = vld [vmem:[#allocation6 + $0x60] sm:$0xff]
    %v353 = vld [vmem:[#allocation6 + $0x68] sm:$0xff]
    %v354 = vld [vmem:[#allocation6 + $0x70] sm:$0xff]
    %v355 = vld [vmem:[#allocation6 + $0x78] sm:$0xff]
    %v356 = vld [vmem:[#allocation6 + $0x80] sm:$0xff]
    %v357 = vld [vmem:[#allocation6 + $0x88] sm:$0xff]
    %v358 = vld [vmem:[#allocation6 + $0x90] sm:$0xff]
    %v359 = vld [vmem:[#allocation6 + $0x98] sm:$0xff]
    %v360 = vld [vmem:[#allocation6 + $0xa0] sm:$0xff]
    %v361 = vld [vmem:[#allocation6 + $0xa8] sm:$0xff]
    %v362 = vld [vmem:[#allocation6 + $0xb0] sm:$0xff]
    %v363 = vld [vmem:[#allocation6 + $0xb8] sm:$0xff]
    %v364 = vld [vmem:[#allocation6 + $0xc0] sm:$0xff]
    %v365 = vld [vmem:[#allocation6 + $0xc8] sm:$0xff]
    %v366 = vld [vmem:[#allocation6 + $0xd0] sm:$0xff]
    %v367 = vld [vmem:[#allocation6 + $0xd8] sm:$0xff]
    %v368 = vld [vmem:[#allocation6 + $0xe0] sm:$0xff]
    %v369 = vld [vmem:[#allocation6 + $0xe8] sm:$0xff]
    %v370 = vld [vmem:[#allocation6 + $0xf0] sm:$0xff]
    %v371 = vld [vmem:[#allocation6 + $0xf8] sm:$0xff]
    %v404 = vunpack.c.l.b16 %v340
    %v405 = vunpack.c.h.b16 %v340
    %v406 = vunpack.c.l.b16 %v341
    %v407 = vunpack.c.h.b16 %v341
    %v408 = vunpack.c.l.b16 %v342
    %v409 = vunpack.c.h.b16 %v342
    %v410 = vunpack.c.l.b16 %v343
    %v411 = vunpack.c.h.b16 %v343
    %v412 = vunpack.c.l.b16 %v344
    %v413 = vunpack.c.h.b16 %v344
    %v414 = vunpack.c.l.b16 %v345
    %v415 = vunpack.c.h.b16 %v345
    %v416 = vunpack.c.l.b16 %v346
    %v417 = vunpack.c.h.b16 %v346
    %v418 = vunpack.c.l.b16 %v347
    %v419 = vunpack.c.h.b16 %v347
    %v420 = vunpack.c.l.b16 %v348
    %v421 = vunpack.c.h.b16 %v348
    %v422 = vunpack.c.l.b16 %v349
    %v423 = vunpack.c.h.b16 %v349
    %v424 = vunpack.c.l.b16 %v350
    %v425 = vunpack.c.h.b16 %v350
    %v426 = vunpack.c.l.b16 %v351
    %v427 = vunpack.c.h.b16 %v351
    %v428 = vunpack.c.l.b16 %v352
    %v429 = vunpack.c.h.b16 %v352
    %v430 = vunpack.c.l.b16 %v353
    %v431 = vunpack.c.h.b16 %v353
    %v432 = vunpack.c.l.b16 %v354
    %v433 = vunpack.c.h.b16 %v354
    %v434 = vunpack.c.l.b16 %v355
    %v435 = vunpack.c.h.b16 %v355
    %v436 = vunpack.c.l.b16 %v356
    %v437 = vunpack.c.h.b16 %v356
    %v438 = vunpack.c.l.b16 %v357
    %v439 = vunpack.c.h.b16 %v357
    %v440 = vunpack.c.l.b16 %v358
    %v441 = vunpack.c.h.b16 %v358
    %v442 = vunpack.c.l.b16 %v359
    %v443 = vunpack.c.h.b16 %v359
    %v444 = vunpack.c.l.b16 %v360
    %v445 = vunpack.c.h.b16 %v360
    %v446 = vunpack.c.l.b16 %v361
    %v447 = vunpack.c.h.b16 %v361
    %v448 = vunpack.c.l.b16 %v362
    %v449 = vunpack.c.h.b16 %v362
    %v450 = vunpack.c.l.b16 %v363
    %v451 = vunpack.c.h.b16 %v363
    %v452 = vunpack.c.l.b16 %v364
    %v453 = vunpack.c.h.b16 %v364
    %v454 = vunpack.c.l.b16 %v365
    %v455 = vunpack.c.h.b16 %v365
    %v456 = vunpack.c.l.b16 %v366
    %v457 = vunpack.c.h.b16 %v366
    %v458 = vunpack.c.l.b16 %v367
    %v459 = vunpack.c.h.b16 %v367
    %v460 = vunpack.c.l.b16 %v368
    %v461 = vunpack.c.h.b16 %v368
    %v462 = vunpack.c.l.b16 %v369
    %v463 = vunpack.c.h.b16 %v369
    %v464 = vunpack.c.l.b16 %v370
    %v465 = vunpack.c.h.b16 %v370
    %v466 = vunpack.c.l.b16 %v371
    %v467 = vunpack.c.h.b16 %v371
    %v468 = vpack.c.b16 %v408, %v404
    %v469 = vpack.c.b16 %v409, %v405
    %v470 = vpack.c.b16 %v410, %v406
    %v471 = vpack.c.b16 %v411, %v407
    %v472 = vpack.c.b16 %v416, %v412
    %v473 = vpack.c.b16 %v417, %v413
    %v474 = vpack.c.b16 %v418, %v414
    %v475 = vpack.c.b16 %v419, %v415
    %v476 = vpack.c.b16 %v424, %v420
    %v477 = vpack.c.b16 %v425, %v421
    %v478 = vpack.c.b16 %v426, %v422
    %v479 = vpack.c.b16 %v427, %v423
    %v480 = vpack.c.b16 %v432, %v428
    %v481 = vpack.c.b16 %v433, %v429
    %v482 = vpack.c.b16 %v434, %v430
    %v483 = vpack.c.b16 %v435, %v431
    %v484 = vpack.c.b16 %v440, %v436
    %v485 = vpack.c.b16 %v441, %v437
    %v486 = vpack.c.b16 %v442, %v438
    %v487 = vpack.c.b16 %v443, %v439
    %v488 = vpack.c.b16 %v448, %v444
    %v489 = vpack.c.b16 %v449, %v445
    %v490 = vpack.c.b16 %v450, %v446
    %v491 = vpack.c.b16 %v451, %v447
    %v492 = vpack.c.b16 %v456, %v452
    %v493 = vpack.c.b16 %v457, %v453
    %v494 = vpack.c.b16 %v458, %v454
    %v495 = vpack.c.b16 %v459, %v455
    %v496 = vpack.c.b16 %v464, %v460
    %v497 = vpack.c.b16 %v465, %v461
    %v498 = vpack.c.b16 %v466, %v462
    %v499 = vpack.c.b16 %v467, %v463
    %532 = vmatprep.subr.bf16.mxu0 %v497
    %533 = vmatpush1.bf16.msra.mxu0 %v496
    %534 = vmatprep.subr.bf16.mxu0 %v493
    %535 = vmatpush1.bf16.msra.mxu0 %v492
    %536 = vmatprep.subr.bf16.mxu0 %v489
    %537 = vmatpush1.bf16.msra.mxu0 %v488
    %538 = vmatprep.subr.bf16.mxu0 %v485
    %539 = vmatpush1.bf16.msra.mxu0 %v484
    %540 = vmatprep.subr.bf16.mxu0 %v481
    %541 = vmatpush1.bf16.msra.mxu0 %v480
    %542 = vmatprep.subr.bf16.mxu0 %v477
    %543 = vmatpush1.bf16.msra.mxu0 %v476
    %544 = vmatprep.subr.bf16.mxu0 %v473
    %545 = vmatpush1.bf16.msra.mxu0 %v472
    %546 = vmatprep.subr.bf16.mxu0 %v469
    %547 = vmatpush1.bf16.msra.mxu0 %v468
    %548 = vmatprep.subr.bf16.mxu0 0
    %549 = vmatpush2.bf16.msra.mxu0 0
    %550 = vmatprep.subr.bf16.mxu0 0
    %551 = vmatpush2.bf16.msra.mxu0 0
    %552 = vmatprep.subr.bf16.mxu0 0
    %553 = vmatpush2.bf16.msra.mxu0 0
    %554 = vmatprep.subr.bf16.mxu0 0
    %555 = vmatpush2.bf16.msra.mxu0 0
    %556 = vmatprep.subr.bf16.mxu0 0
    %557 = vmatpush2.bf16.msra.mxu0 0
    %558 = vmatprep.subr.bf16.mxu0 0
    %559 = vmatpush2.bf16.msra.mxu0 0
    %560 = vmatprep.subr.bf16.mxu0 0
    %561 = vmatpush2.bf16.msra.mxu0 0
    %562 = vmatprep.subr.bf16.mxu0 0
    %563 = vmatpush2.bf16.msra.mxu0 0
    %564 = vmatprep.mubr.bf16.mxu0 0
    %565 = vmatmul.mubr.bf16.gmra.mxu0 0
    %v566 = vpop.f32.mrf.mxu0
    %v567 = vadd.f32 0.0, %v566
    %v568 = vpop.f32.mrf.mxu0
    %v569 = vadd.f32 0.0, %v568
    %v570 = vpop.f32.mrf.mxu0
    %v571 = vpop.f32.mrf.mxu0
    %572 = vdwg.mxu0
    %573 = vmatprep.subr.bf16.mxu0 %v499
    %574 = vmatpush1.bf16.msra.mxu0 %v498
    %575 = vmatprep.subr.bf16.mxu0 %v495
    %576 = vmatpush1.bf16.msra.mxu0 %v494
    %577 = vmatprep.subr.bf16.mxu0 %v491
    %578 = vmatpush1.bf16.msra.mxu0 %v490
    %579 = vmatprep.subr.bf16.mxu0 %v487
    %580 = vmatpush1.bf16.msra.mxu0 %v486
    %581 = vmatprep.subr.bf16.mxu0 %v483
    %582 = vmatpush1.bf16.msra.mxu0 %v482
    %583 = vmatprep.subr.bf16.mxu0 %v479
    %584 = vmatpush1.bf16.msra.mxu0 %v478
    %585 = vmatprep.subr.bf16.mxu0 %v475
    %586 = vmatpush1.bf16.msra.mxu0 %v474
    %587 = vmatprep.subr.bf16.mxu0 %v471
    %588 = vmatpush1.bf16.msra.mxu0 %v470
    %589 = vmatprep.subr.bf16.mxu0 0
    %590 = vmatpush2.bf16.msra.mxu0 0
    %591 = vmatprep.subr.bf16.mxu0 0
    %592 = vmatpush2.bf16.msra.mxu0 0
    %593 = vmatprep.subr.bf16.mxu0 0
    %594 = vmatpush2.bf16.msra.mxu0 0
    %595 = vmatprep.subr.bf16.mxu0 0
    %596 = vmatpush2.bf16.msra.mxu0 0
    %597 = vmatprep.subr.bf16.mxu0 0
    %598 = vmatpush2.bf16.msra.mxu0 0
    %599 = vmatprep.subr.bf16.mxu0 0
    %600 = vmatpush2.bf16.msra.mxu0 0
    %601 = vmatprep.subr.bf16.mxu0 0
    %602 = vmatpush2.bf16.msra.mxu0 0
    %603 = vmatprep.subr.bf16.mxu0 0
    %604 = vmatpush2.bf16.msra.mxu0 0
    %605 = vmatprep.mubr.bf16.mxu0 0
    %606 = vmatmul.mubr.bf16.gmra.mxu0 0
    %v607 = vpop.f32.mrf.mxu0
    %v608 = vadd.f32 0.0, %v607
    %v609 = vpop.f32.mrf.mxu0
    %v610 = vadd.f32 0.0, %v609
    %v611 = vpop.f32.mrf.mxu0
    %v612 = vpop.f32.mrf.mxu0
    %613 = vdwg.mxu0
    %v614 = vadd.f32 %v336, %v567
    %v615 = vadd.f32 %v337, %v569
    %v616 = vadd.f32 %v338, %v608
    %v617 = vadd.f32 %v339, %v610
    %v618 = vmul.f32 %v614, 0.5
    %v619 = vtanh.pop %v618
    %v620 = vadd.f32 %v619, 1.0
    %v621 = vmul.f32 %v620, 0.5
    %v622 = vmul.f32 %v615, 0.5
    %v623 = vtanh.pop %v622
    %v624 = vadd.f32 %v623, 1.0
    %v625 = vmul.f32 %v624, 0.5
    %v626 = vtanh.pop %v616
    %v627 = vmul.f32 %v617, 0.5
    %v628 = vtanh.pop %v627
    %v629 = vadd.f32 %v628, 1.0
    %v630 = vmul.f32 %v629, 0.5
    %v631 = vmul.f32 %v625, 0.0
    %v632 = vmul.f32 %v621, %v626
    %v633 = vadd.f32 %v631, %v632
    %v634 = vtanh.pop %v633
    %v635 = vmul.f32 %v630, %v634
    %v636 = vld [vmem:[#allocation2 + $0x20] sm:$0xff]
    %v637 = vld [vmem:[#allocation2 + $0x28] sm:$0xff]
    %v638 = vld [vmem:[#allocation2 + $0x30] sm:$0xff]
    %v639 = vld [vmem:[#allocation2 + $0x38] sm:$0xff]
    %v640 = vpack.c.bf16 %v635, %v635
    %641 = vmatprep.subr.bf16.mxu0 %v497
    %642 = vmatpush1.bf16.msra.mxu0 %v496
    %643 = vmatprep.subr.bf16.mxu0 %v493
    %644 = vmatpush1.bf16.msra.mxu0 %v492
    %645 = vmatprep.subr.bf16.mxu0 %v489
    %646 = vmatpush1.bf16.msra.mxu0 %v488
    %647 = vmatprep.subr.bf16.mxu0 %v485
    %648 = vmatpush1.bf16.msra.mxu0 %v484
    %649 = vmatprep.subr.bf16.mxu0 %v481
    %650 = vmatpush1.bf16.msra.mxu0 %v480
    %651 = vmatprep.subr.bf16.mxu0 %v477
    %652 = vmatpush1.bf16.msra.mxu0 %v476
    %653 = vmatprep.subr.bf16.mxu0 %v473
    %654 = vmatpush1.bf16.msra.mxu0 %v472
    %655 = vmatprep.subr.bf16.mxu0 %v469
    %656 = vmatpush1.bf16.msra.mxu0 %v468
    %657 = vmatprep.subr.bf16.mxu0 0
    %658 = vmatpush2.bf16.msra.mxu0 0
    %659 = vmatprep.subr.bf16.mxu0 0
    %660 = vmatpush2.bf16.msra.mxu0 0
    %661 = vmatprep.subr.bf16.mxu0 0
    %662 = vmatpush2.bf16.msra.mxu0 0
    %663 = vmatprep.subr.bf16.mxu0 0
    %664 = vmatpush2.bf16.msra.mxu0 0
    %665 = vmatprep.subr.bf16.mxu0 0
    %666 = vmatpush2.bf16.msra.mxu0 0
    %667 = vmatprep.subr.bf16.mxu0 0
    %668 = vmatpush2.bf16.msra.mxu0 0
    %669 = vmatprep.subr.bf16.mxu0 0
    %670 = vmatpush2.bf16.msra.mxu0 0
    %671 = vmatprep.subr.bf16.mxu0 0
    %672 = vmatpush2.bf16.msra.mxu0 0
    %673 = vmatprep.mubr.bf16.mxu0 0
    %674 = vmatmul.mubr.bf16.gmra.mxu0 %v640
    %v675 = vpop.f32.mrf.mxu0
    %v676 = vadd.f32 0.0, %v675
    %v677 = vpop.f32.mrf.mxu0
    %v678 = vadd.f32 0.0, %v677
    %v679 = vpop.f32.mrf.mxu0
    %v680 = vpop.f32.mrf.mxu0
    %681 = vdwg.mxu0
    %682 = vmatprep.subr.bf16.mxu0 %v499
    %683 = vmatpush1.bf16.msra.mxu0 %v498
    %684 = vmatprep.subr.bf16.mxu0 %v495
    %685 = vmatpush1.bf16.msra.mxu0 %v494
    %686 = vmatprep.subr.bf16.mxu0 %v491
    %687 = vmatpush1.bf16.msra.mxu0 %v490
    %688 = vmatprep.subr.bf16.mxu0 %v487
    %689 = vmatpush1.bf16.msra.mxu0 %v486
    %690 = vmatprep.subr.bf16.mxu0 %v483
    %691 = vmatpush1.bf16.msra.mxu0 %v482
    %692 = vmatprep.subr.bf16.mxu0 %v479
    %693 = vmatpush1.bf16.msra.mxu0 %v478
    %694 = vmatprep.subr.bf16.mxu0 %v475
    %695 = vmatpush1.bf16.msra.mxu0 %v474
    %696 = vmatprep.subr.bf16.mxu0 %v471
    %697 = vmatpush1.bf16.msra.mxu0 %v470
    %698 = vmatprep.subr.bf16.mxu0 0
    %699 = vmatpush2.bf16.msra.mxu0 0
    %700 = vmatprep.subr.bf16.mxu0 0
    %701 = vmatpush2.bf16.msra.mxu0 0
    %702 = vmatprep.subr.bf16.mxu0 0
    %703 = vmatpush2.bf16.msra.mxu0 0
    %704 = vmatprep.subr.bf16.mxu0 0
    %705 = vmatpush2.bf16.msra.mxu0 0
    %706 = vmatprep.subr.bf16.mxu0 0
    %707 = vmatpush2.bf16.msra.mxu0 0
    %708 = vmatprep.subr.bf16.mxu0 0
    %709 = vmatpush2.bf16.msra.mxu0 0
    %710 = vmatprep.subr.bf16.mxu0 0
    %711 = vmatpush2.bf16.msra.mxu0 0
    %712 = vmatprep.subr.bf16.mxu0 0
    %713 = vmatpush2.bf16.msra.mxu0 0
    %714 = vmatprep.mubr.bf16.mxu0 0
    %715 = vmatmul.mubr.bf16.gmra.mxu0 %v640
    %v716 = vpop.f32.mrf.mxu0
    %v717 = vadd.f32 0.0, %v716
    %v718 = vpop.f32.mrf.mxu0
    %v719 = vadd.f32 0.0, %v718
    %v720 = vpop.f32.mrf.mxu0
    %v721 = vpop.f32.mrf.mxu0
    %722 = vdwg.mxu0
    %v723 = vadd.f32 %v636, %v676
    %v724 = vadd.f32 %v637, %v678
    %v725 = vadd.f32 %v638, %v717
    %v726 = vadd.f32 %v639, %v719
    %v727 = vmul.f32 %v723, 0.5
    %v728 = vtanh.pop %v727
    %v729 = vadd.f32 %v728, 1.0
    %v730 = vmul.f32 %v729, 0.5
    %v731 = vmul.f32 %v724, 0.5
    %v732 = vtanh.pop %v731
    %v733 = vadd.f32 %v732, 1.0
    %v734 = vmul.f32 %v733, 0.5
    %v735 = vtanh.pop %v725
    %v736 = vmul.f32 %v726, 0.5
    %v737 = vtanh.pop %v736
    %v738 = vadd.f32 %v737, 1.0
    %v739 = vmul.f32 %v738, 0.5
    %v740 = vmul.f32 %v734, %v633
    %v741 = vmul.f32 %v730, %v735
    %v742 = vadd.f32 %v740, %v741
    %v743 = vtanh.pop %v742
    %v744 = vmul.f32 %v739, %v743
    %v745 = vld [vmem:[#allocation2 + $0x40] sm:$0xff]
    %v746 = vld [vmem:[#allocation2 + $0x48] sm:$0xff]
    %v747 = vld [vmem:[#allocation2 + $0x50] sm:$0xff]
    %v748 = vld [vmem:[#allocation2 + $0x58] sm:$0xff]
    %v749 = vpack.c.bf16 %v744, %v744
    %750 = vmatprep.subr.bf16.mxu0 %v497
    %751 = vmatpush1.bf16.msra.mxu0 %v496
    %752 = vmatprep.subr.bf16.mxu0 %v493
    %753 = vmatpush1.bf16.msra.mxu0 %v492
    %754 = vmatprep.subr.bf16.mxu0 %v489
    %755 = vmatpush1.bf16.msra.mxu0 %v488
    %756 = vmatprep.subr.bf16.mxu0 %v485
    %757 = vmatpush1.bf16.msra.mxu0 %v484
    %758 = vmatprep.subr.bf16.mxu0 %v481
    %759 = vmatpush1.bf16.msra.mxu0 %v480
    %760 = vmatprep.subr.bf16.mxu0 %v477
    %761 = vmatpush1.bf16.msra.mxu0 %v476
    %762 = vmatprep.subr.bf16.mxu0 %v473
    %763 = vmatpush1.bf16.msra.mxu0 %v472
    %764 = vmatprep.subr.bf16.mxu0 %v469
    %765 = vmatpush1.bf16.msra.mxu0 %v468
    %766 = vmatprep.subr.bf16.mxu0 0
    %767 = vmatpush2.bf16.msra.mxu0 0
    %768 = vmatprep.subr.bf16.mxu0 0
    %769 = vmatpush2.bf16.msra.mxu0 0
    %770 = vmatprep.subr.bf16.mxu0 0
    %771 = vmatpush2.bf16.msra.mxu0 0
    %772 = vmatprep.subr.bf16.mxu0 0
    %773 = vmatpush2.bf16.msra.mxu0 0
    %774 = vmatprep.subr.bf16.mxu0 0
    %775 = vmatpush2.bf16.msra.mxu0 0
    %776 = vmatprep.subr.bf16.mxu0 0
    %777 = vmatpush2.bf16.msra.mxu0 0
    %778 = vmatprep.subr.bf16.mxu0 0
    %779 = vmatpush2.bf16.msra.mxu0 0
    %780 = vmatprep.subr.bf16.mxu0 0
    %781 = vmatpush2.bf16.msra.mxu0 0
    %782 = vmatprep.mubr.bf16.mxu0 0
    %783 = vmatmul.mubr.bf16.gmra.mxu0 %v749
    %v784 = vpop.f32.mrf.mxu0
    %v785 = vadd.f32 0.0, %v784
    %v786 = vpop.f32.mrf.mxu0
    %v787 = vadd.f32 0.0, %v786
    %v788 = vpop.f32.mrf.mxu0
    %v789 = vpop.f32.mrf.mxu0
    %790 = vdwg.mxu0
    %791 = vmatprep.subr.bf16.mxu0 %v499
    %792 = vmatpush1.bf16.msra.mxu0 %v498
    %793 = vmatprep.subr.bf16.mxu0 %v495
    %794 = vmatpush1.bf16.msra.mxu0 %v494
    %795 = vmatprep.subr.bf16.mxu0 %v491
    %796 = vmatpush1.bf16.msra.mxu0 %v490
    %797 = vmatprep.subr.bf16.mxu0 %v487
    %798 = vmatpush1.bf16.msra.mxu0 %v486
    %799 = vmatprep.subr.bf16.mxu0 %v483
    %800 = vmatpush1.bf16.msra.mxu0 %v482
    %801 = vmatprep.subr.bf16.mxu0 %v479
    %802 = vmatpush1.bf16.msra.mxu0 %v478
    %803 = vmatprep.subr.bf16.mxu0 %v475
    %804 = vmatpush1.bf16.msra.mxu0 %v474
    %805 = vmatprep.subr.bf16.mxu0 %v471
    %806 = vmatpush1.bf16.msra.mxu0 %v470
    %807 = vmatprep.subr.bf16.mxu0 0
    %808 = vmatpush2.bf16.msra.mxu0 0
    %809 = vmatprep.subr.bf16.mxu0 0
    %810 = vmatpush2.bf16.msra.mxu0 0
    %811 = vmatprep.subr.bf16.mxu0 0
    %812 = vmatpush2.bf16.msra.mxu0 0
    %813 = vmatprep.subr.bf16.mxu0 0
    %814 = vmatpush2.bf16.msra.mxu0 0
    %815 = vmatprep.subr.bf16.mxu0 0
    %816 = vmatpush2.bf16.msra.mxu0 0
    %817 = vmatprep.subr.bf16.mxu0 0
    %818 = vmatpush2.bf16.msra.mxu0 0
    %819 = vmatprep.subr.bf16.mxu0 0
    %820 = vmatpush2.bf16.msra.mxu0 0
    %821 = vmatprep.subr.bf16.mxu0 0
    %822 = vmatpush2.bf16.msra.mxu0 0
    %823 = vmatprep.mubr.bf16.mxu0 0
    %824 = vmatmul.mubr.bf16.gmra.mxu0 %v749
    %v825 = vpop.f32.mrf.mxu0
    %v826 = vadd.f32 0.0, %v825
    %v827 = vpop.f32.mrf.mxu0
    %v828 = vadd.f32 0.0, %v827
    %v829 = vpop.f32.mrf.mxu0
    %v830 = vpop.f32.mrf.mxu0
    %831 = vdwg.mxu0
    %v832 = vadd.f32 %v745, %v785
    %v833 = vadd.f32 %v746, %v787
    %v834 = vadd.f32 %v747, %v826
    %v835 = vadd.f32 %v748, %v828
    %v836 = vmul.f32 %v832, 0.5
    %v837 = vtanh.pop %v836
    %v838 = vadd.f32 %v837, 1.0
    %v839 = vmul.f32 %v838, 0.5
    %v840 = vmul.f32 %v833, 0.5
    %v841 = vtanh.pop %v840
    %v842 = vadd.f32 %v841, 1.0
    %v843 = vmul.f32 %v842, 0.5
    %v844 = vtanh.pop %v834
    %v845 = vmul.f32 %v835, 0.5
    %v846 = vtanh.pop %v845
    %v847 = vadd.f32 %v846, 1.0
    %v848 = vmul.f32 %v847, 0.5
    %v849 = vmul.f32 %v843, %v742
    %v850 = vmul.f32 %v839, %v844
    %v851 = vadd.f32 %v849, %v850
    %v852 = vtanh.pop %v851
    %v853 = vmul.f32 %v848, %v852
    %v854 = vld [vmem:[#allocation2 + $0x60] sm:$0xff]
    %v855 = vld [vmem:[#allocation2 + $0x68] sm:$0xff]
    %v856 = vld [vmem:[#allocation2 + $0x70] sm:$0xff]
    %v857 = vld [vmem:[#allocation2 + $0x78] sm:$0xff]
    %v858 = vpack.c.bf16 %v853, %v853
    %859 = vmatprep.subr.bf16.mxu0 %v497
    %860 = vmatpush1.bf16.msra.mxu0 %v496
    %861 = vmatprep.subr.bf16.mxu0 %v493
    %862 = vmatpush1.bf16.msra.mxu0 %v492
    %863 = vmatprep.subr.bf16.mxu0 %v489
    %864 = vmatpush1.bf16.msra.mxu0 %v488
    %865 = vmatprep.subr.bf16.mxu0 %v485
    %866 = vmatpush1.bf16.msra.mxu0 %v484
    %867 = vmatprep.subr.bf16.mxu0 %v481
    %868 = vmatpush1.bf16.msra.mxu0 %v480
    %869 = vmatprep.subr.bf16.mxu0 %v477
    %870 = vmatpush1.bf16.msra.mxu0 %v476
    %871 = vmatprep.subr.bf16.mxu0 %v473
    %872 = vmatpush1.bf16.msra.mxu0 %v472
    %873 = vmatprep.subr.bf16.mxu0 %v469
    %874 = vmatpush1.bf16.msra.mxu0 %v468
    %875 = vmatprep.subr.bf16.mxu0 0
    %876 = vmatpush2.bf16.msra.mxu0 0
    %877 = vmatprep.subr.bf16.mxu0 0
    %878 = vmatpush2.bf16.msra.mxu0 0
    %879 = vmatprep.subr.bf16.mxu0 0
    %880 = vmatpush2.bf16.msra.mxu0 0
    %881 = vmatprep.subr.bf16.mxu0 0
    %882 = vmatpush2.bf16.msra.mxu0 0
    %883 = vmatprep.subr.bf16.mxu0 0
    %884 = vmatpush2.bf16.msra.mxu0 0
    %885 = vmatprep.subr.bf16.mxu0 0
    %886 = vmatpush2.bf16.msra.mxu0 0
    %887 = vmatprep.subr.bf16.mxu0 0
    %888 = vmatpush2.bf16.msra.mxu0 0
    %889 = vmatprep.subr.bf16.mxu0 0
    %890 = vmatpush2.bf16.msra.mxu0 0
    %891 = vmatprep.mubr.bf16.mxu0 0
    %892 = vmatmul.mubr.bf16.gmra.mxu0 %v858
    %v893 = vpop.f32.mrf.mxu0
    %v894 = vadd.f32 0.0, %v893
    %v895 = vpop.f32.mrf.mxu0
    %v896 = vadd.f32 0.0, %v895
    %v897 = vpop.f32.mrf.mxu0
    %v898 = vpop.f32.mrf.mxu0
    %899 = vdwg.mxu0
    %900 = vmatprep.subr.bf16.mxu0 %v499
    %901 = vmatpush1.bf16.msra.mxu0 %v498
    %902 = vmatprep.subr.bf16.mxu0 %v495
    %903 = vmatpush1.bf16.msra.mxu0 %v494
    %904 = vmatprep.subr.bf16.mxu0 %v491
    %905 = vmatpush1.bf16.msra.mxu0 %v490
    %906 = vmatprep.subr.bf16.mxu0 %v487
    %907 = vmatpush1.bf16.msra.mxu0 %v486
    %908 = vmatprep.subr.bf16.mxu0 %v483
    %909 = vmatpush1.bf16.msra.mxu0 %v482
    %910 = vmatprep.subr.bf16.mxu0 %v479
    %911 = vmatpush1.bf16.msra.mxu0 %v478
    %912 = vmatprep.subr.bf16.mxu0 %v475
    %913 = vmatpush1.bf16.msra.mxu0 %v474
    %914 = vmatprep.subr.bf16.mxu0 %v471
    %915 = vmatpush1.bf16.msra.mxu0 %v470
    %916 = vmatprep.subr.bf16.mxu0 0
    %917 = vmatpush2.bf16.msra.mxu0 0
    %918 = vmatprep.subr.bf16.mxu0 0
    %919 = vmatpush2.bf16.msra.mxu0 0
    %920 = vmatprep.subr.bf16.mxu0 0
    %921 = vmatpush2.bf16.msra.mxu0 0
    %922 = vmatprep.subr.bf16.mxu0 0
    %923 = vmatpush2.bf16.msra.mxu0 0
    %924 = vmatprep.subr.bf16.mxu0 0
    %925 = vmatpush2.bf16.msra.mxu0 0
    %926 = vmatprep.subr.bf16.mxu0 0
    %927 = vmatpush2.bf16.msra.mxu0 0
    %928 = vmatprep.subr.bf16.mxu0 0
    %929 = vmatpush2.bf16.msra.mxu0 0
    %930 = vmatprep.subr.bf16.mxu0 0
    %931 = vmatpush2.bf16.msra.mxu0 0
    %932 = vmatprep.mubr.bf16.mxu0 0
    %933 = vmatmul.mubr.bf16.gmra.mxu0 %v858
    %v934 = vpop.f32.mrf.mxu0
    %v935 = vadd.f32 0.0, %v934
    %v936 = vpop.f32.mrf.mxu0
    %v937 = vadd.f32 0.0, %v936
    %v938 = vpop.f32.mrf.mxu0
    %v939 = vpop.f32.mrf.mxu0
    %940 = vdwg.mxu0
    %v941 = vadd.f32 %v854, %v894
    %v942 = vadd.f32 %v855, %v896
    %v943 = vadd.f32 %v856, %v935
    %v944 = vadd.f32 %v857, %v937
    %v945 = vmul.f32 %v941, 0.5
    %v946 = vtanh.pop %v945
    %v947 = vadd.f32 %v946, 1.0
    %v948 = vmul.f32 %v947, 0.5
    %v949 = vmul.f32 %v942, 0.5
    %v950 = vtanh.pop %v949
    %v951 = vadd.f32 %v950, 1.0
    %v952 = vmul.f32 %v951, 0.5
    %v953 = vtanh.pop %v943
    %v954 = vmul.f32 %v944, 0.5
    %v955 = vtanh.pop %v954
    %v956 = vadd.f32 %v955, 1.0
    %v957 = vmul.f32 %v956, 0.5
    %v958 = vmul.f32 %v952, %v851
    %v959 = vmul.f32 %v948, %v953
    %v960 = vadd.f32 %v958, %v959
    %v961 = vtanh.pop %v960
    %v962 = vmul.f32 %v957, %v961
    %v963 = vld [vmem:[#allocation2 + $0x80] sm:$0xff]
    %v964 = vld [vmem:[#allocation2 + $0x88] sm:$0xff]
    %v965 = vld [vmem:[#allocation2 + $0x90] sm:$0xff]
    %v966 = vld [vmem:[#allocation2 + $0x98] sm:$0xff]
    %v967 = vpack.c.bf16 %v962, %v962
    %968 = vmatprep.subr.bf16.mxu0 %v497
    %969 = vmatpush1.bf16.msra.mxu0 %v496
    %970 = vmatprep.subr.bf16.mxu0 %v493
    %971 = vmatpush1.bf16.msra.mxu0 %v492
    %972 = vmatprep.subr.bf16.mxu0 %v489
    %973 = vmatpush1.bf16.msra.mxu0 %v488
    %974 = vmatprep.subr.bf16.mxu0 %v485
    %975 = vmatpush1.bf16.msra.mxu0 %v484
    %976 = vmatprep.subr.bf16.mxu0 %v481
    %977 = vmatpush1.bf16.msra.mxu0 %v480
    %978 = vmatprep.subr.bf16.mxu0 %v477
    %979 = vmatpush1.bf16.msra.mxu0 %v476
    %980 = vmatprep.subr.bf16.mxu0 %v473
    %981 = vmatpush1.bf16.msra.mxu0 %v472
    %982 = vmatprep.subr.bf16.mxu0 %v469
    %983 = vmatpush1.bf16.msra.mxu0 %v468
    %984 = vmatprep.subr.bf16.mxu0 0
    %985 = vmatpush2.bf16.msra.mxu0 0
    %986 = vmatprep.subr.bf16.mxu0 0
    %987 = vmatpush2.bf16.msra.mxu0 0
    %988 = vmatprep.subr.bf16.mxu0 0
    %989 = vmatpush2.bf16.msra.mxu0 0
    %990 = vmatprep.subr.bf16.mxu0 0
    %991 = vmatpush2.bf16.msra.mxu0 0
    %992 = vmatprep.subr.bf16.mxu0 0
    %993 = vmatpush2.bf16.msra.mxu0 0
    %994 = vmatprep.subr.bf16.mxu0 0
    %995 = vmatpush2.bf16.msra.mxu0 0
    %996 = vmatprep.subr.bf16.mxu0 0
    %997 = vmatpush2.bf16.msra.mxu0 0
    %998 = vmatprep.subr.bf16.mxu0 0
    %999 = vmatpush2.bf16.msra.mxu0 0
    %1000 = vmatprep.mubr.bf16.mxu0 0
    %1001 = vmatmul.mubr.bf16.gmra.mxu0 %v967
    %v1002 = vpop.f32.mrf.mxu0
    %v1003 = vadd.f32 0.0, %v1002
    %v1004 = vpop.f32.mrf.mxu0
    %v1005 = vadd.f32 0.0, %v1004
    %v1006 = vpop.f32.mrf.mxu0
    %v1007 = vpop.f32.mrf.mxu0
    %1008 = vdwg.mxu0
    %1009 = vmatprep.subr.bf16.mxu0 %v499
    %1010 = vmatpush1.bf16.msra.mxu0 %v498
    %1011 = vmatprep.subr.bf16.mxu0 %v495
    %1012 = vmatpush1.bf16.msra.mxu0 %v494
    %1013 = vmatprep.subr.bf16.mxu0 %v491
    %1014 = vmatpush1.bf16.msra.mxu0 %v490
    %1015 = vmatprep.subr.bf16.mxu0 %v487
    %1016 = vmatpush1.bf16.msra.mxu0 %v486
    %1017 = vmatprep.subr.bf16.mxu0 %v483
    %1018 = vmatpush1.bf16.msra.mxu0 %v482
    %1019 = vmatprep.subr.bf16.mxu0 %v479
    %1020 = vmatpush1.bf16.msra.mxu0 %v478
    %1021 = vmatprep.subr.bf16.mxu0 %v475
    %1022 = vmatpush1.bf16.msra.mxu0 %v474
    %1023 = vmatprep.subr.bf16.mxu0 %v471
    %1024 = vmatpush1.bf16.msra.mxu0 %v470
    %1025 = vmatprep.subr.bf16.mxu0 0
    %1026 = vmatpush2.bf16.msra.mxu0 0
    %1027 = vmatprep.subr.bf16.mxu0 0
    %1028 = vmatpush2.bf16.msra.mxu0 0
    %1029 = vmatprep.subr.bf16.mxu0 0
    %1030 = vmatpush2.bf16.msra.mxu0 0
    %1031 = vmatprep.subr.bf16.mxu0 0
    %1032 = vmatpush2.bf16.msra.mxu0 0
    %1033 = vmatprep.subr.bf16.mxu0 0
    %1034 = vmatpush2.bf16.msra.mxu0 0
    %1035 = vmatprep.subr.bf16.mxu0 0
    %1036 = vmatpush2.bf16.msra.mxu0 0
    %1037 = vmatprep.subr.bf16.mxu0 0
    %1038 = vmatpush2.bf16.msra.mxu0 0
    %1039 = vmatprep.subr.bf16.mxu0 0
    %1040 = vmatpush2.bf16.msra.mxu0 0
    %1041 = vmatprep.mubr.bf16.mxu0 0
    %1042 = vmatmul.mubr.bf16.gmra.mxu0 %v967
    %v1043 = vpop.f32.mrf.mxu0
    %v1044 = vadd.f32 0.0, %v1043
    %v1045 = vpop.f32.mrf.mxu0
    %v1046 = vadd.f32 0.0, %v1045
    %v1047 = vpop.f32.mrf.mxu0
    %v1048 = vpop.f32.mrf.mxu0
    %1049 = vdwg.mxu0
    %v1050 = vadd.f32 %v963, %v1003
    %v1051 = vadd.f32 %v964, %v1005
    %v1052 = vadd.f32 %v965, %v1044
    %v1053 = vadd.f32 %v966, %v1046
    %v1054 = vmul.f32 %v1050, 0.5
    %v1055 = vtanh.pop %v1054
    %v1056 = vadd.f32 %v1055, 1.0
    %v1057 = vmul.f32 %v1056, 0.5
    %v1058 = vmul.f32 %v1051, 0.5
    %v1059 = vtanh.pop %v1058
    %v1060 = vadd.f32 %v1059, 1.0
    %v1061 = vmul.f32 %v1060, 0.5
    %v1062 = vtanh.pop %v1052
    %v1063 = vmul.f32 %v1053, 0.5
    %v1064 = vtanh.pop %v1063
    %v1065 = vadd.f32 %v1064, 1.0
    %v1066 = vmul.f32 %v1065, 0.5
    %v1067 = vmul.f32 %v1061, %v960
    %v1068 = vmul.f32 %v1057, %v1062
    %v1069 = vadd.f32 %v1067, %v1068
    %v1070 = vtanh.pop %v1069
    %v1071 = vmul.f32 %v1066, %v1070
    %v1072 = vld [vmem:[#allocation2 + $0xa0] sm:$0xff]
    %v1073 = vld [vmem:[#allocation2 + $0xa8] sm:$0xff]
    %v1074 = vld [vmem:[#allocation2 + $0xb0] sm:$0xff]
    %v1075 = vld [vmem:[#allocation2 + $0xb8] sm:$0xff]
    %v1076 = vpack.c.bf16 %v1071, %v1071
    %1077 = vmatprep.subr.bf16.mxu0 %v497
    %1078 = vmatpush1.bf16.msra.mxu0 %v496
    %1079 = vmatprep.subr.bf16.mxu0 %v493
    %1080 = vmatpush1.bf16.msra.mxu0 %v492
    %1081 = vmatprep.subr.bf16.mxu0 %v489
    %1082 = vmatpush1.bf16.msra.mxu0 %v488
    %1083 = vmatprep.subr.bf16.mxu0 %v485
    %1084 = vmatpush1.bf16.msra.mxu0 %v484
    %1085 = vmatprep.subr.bf16.mxu0 %v481
    %1086 = vmatpush1.bf16.msra.mxu0 %v480
    %1087 = vmatprep.subr.bf16.mxu0 %v477
    %1088 = vmatpush1.bf16.msra.mxu0 %v476
    %1089 = vmatprep.subr.bf16.mxu0 %v473
    %1090 = vmatpush1.bf16.msra.mxu0 %v472
    %1091 = vmatprep.subr.bf16.mxu0 %v469
    %1092 = vmatpush1.bf16.msra.mxu0 %v468
    %1093 = vmatprep.subr.bf16.mxu0 0
    %1094 = vmatpush2.bf16.msra.mxu0 0
    %1095 = vmatprep.subr.bf16.mxu0 0
    %1096 = vmatpush2.bf16.msra.mxu0 0
    %1097 = vmatprep.subr.bf16.mxu0 0
    %1098 = vmatpush2.bf16.msra.mxu0 0
    %1099 = vmatprep.subr.bf16.mxu0 0
    %1100 = vmatpush2.bf16.msra.mxu0 0
    %1101 = vmatprep.subr.bf16.mxu0 0
    %1102 = vmatpush2.bf16.msra.mxu0 0
    %1103 = vmatprep.subr.bf16.mxu0 0
    %1104 = vmatpush2.bf16.msra.mxu0 0
    %1105 = vmatprep.subr.bf16.mxu0 0
    %1106 = vmatpush2.bf16.msra.mxu0 0
    %1107 = vmatprep.subr.bf16.mxu0 0
    %1108 = vmatpush2.bf16.msra.mxu0 0
    %1109 = vmatprep.mubr.bf16.mxu0 0
    %1110 = vmatmul.mubr.bf16.gmra.mxu0 %v1076
    %v1111 = vpop.f32.mrf.mxu0
    %v1112 = vadd.f32 0.0, %v1111
    %v1113 = vpop.f32.mrf.mxu0
    %v1114 = vadd.f32 0.0, %v1113
    %v1115 = vpop.f32.mrf.mxu0
    %v1116 = vpop.f32.mrf.mxu0
    %1117 = vdwg.mxu0
    %1118 = vmatprep.subr.bf16.mxu0 %v499
    %1119 = vmatpush1.bf16.msra.mxu0 %v498
    %1120 = vmatprep.subr.bf16.mxu0 %v495
    %1121 = vmatpush1.bf16.msra.mxu0 %v494
    %1122 = vmatprep.subr.bf16.mxu0 %v491
    %1123 = vmatpush1.bf16.msra.mxu0 %v490
    %1124 = vmatprep.subr.bf16.mxu0 %v487
    %1125 = vmatpush1.bf16.msra.mxu0 %v486
    %1126 = vmatprep.subr.bf16.mxu0 %v483
    %1127 = vmatpush1.bf16.msra.mxu0 %v482
    %1128 = vmatprep.subr.bf16.mxu0 %v479
    %1129 = vmatpush1.bf16.msra.mxu0 %v478
    %1130 = vmatprep.subr.bf16.mxu0 %v475
    %1131 = vmatpush1.bf16.msra.mxu0 %v474
    %1132 = vmatprep.subr.bf16.mxu0 %v471
    %1133 = vmatpush1.bf16.msra.mxu0 %v470
    %1134 = vmatprep.subr.bf16.mxu0 0
    %1135 = vmatpush2.bf16.msra.mxu0 0
    %1136 = vmatprep.subr.bf16.mxu0 0
    %1137 = vmatpush2.bf16.msra.mxu0 0
    %1138 = vmatprep.subr.bf16.mxu0 0
    %1139 = vmatpush2.bf16.msra.mxu0 0
    %1140 = vmatprep.subr.bf16.mxu0 0
    %1141 = vmatpush2.bf16.msra.mxu0 0
    %1142 = vmatprep.subr.bf16.mxu0 0
    %1143 = vmatpush2.bf16.msra.mxu0 0
    %1144 = vmatprep.subr.bf16.mxu0 0
    %1145 = vmatpush2.bf16.msra.mxu0 0
    %1146 = vmatprep.subr.bf16.mxu0 0
    %1147 = vmatpush2.bf16.msra.mxu0 0
    %1148 = vmatprep.subr.bf16.mxu0 0
    %1149 = vmatpush2.bf16.msra.mxu0 0
    %1150 = vmatprep.mubr.bf16.mxu0 0
    %1151 = vmatmul.mubr.bf16.gmra.mxu0 %v1076
    %v1152 = vpop.f32.mrf.mxu0
    %v1153 = vadd.f32 0.0, %v1152
    %v1154 = vpop.f32.mrf.mxu0
    %v1155 = vadd.f32 0.0, %v1154
    %v1156 = vpop.f32.mrf.mxu0
    %v1157 = vpop.f32.mrf.mxu0
    %1158 = vdwg.mxu0
    %v1159 = vadd.f32 %v1072, %v1112
    %v1160 = vadd.f32 %v1073, %v1114
    %v1161 = vadd.f32 %v1074, %v1153
    %v1162 = vadd.f32 %v1075, %v1155
    %v1163 = vmul.f32 %v1159, 0.5
    %v1164 = vtanh.pop %v1163
    %v1165 = vadd.f32 %v1164, 1.0
    %v1166 = vmul.f32 %v1165, 0.5
    %v1167 = vmul.f32 %v1160, 0.5
    %v1168 = vtanh.pop %v1167
    %v1169 = vadd.f32 %v1168, 1.0
    %v1170 = vmul.f32 %v1169, 0.5
    %v1171 = vtanh.pop %v1161
    %v1172 = vmul.f32 %v1162, 0.5
    %v1173 = vtanh.pop %v1172
    %v1174 = vadd.f32 %v1173, 1.0
    %v1175 = vmul.f32 %v1174, 0.5
    %v1176 = vmul.f32 %v1170, %v1069
    %v1177 = vmul.f32 %v1166, %v1171
    %v1178 = vadd.f32 %v1176, %v1177
    %v1179 = vtanh.pop %v1178
    %v1180 = vmul.f32 %v1175, %v1179
    %v1181 = vld [vmem:[#allocation2 + $0xc0] sm:$0xff]
    %v1182 = vld [vmem:[#allocation2 + $0xc8] sm:$0xff]
    %v1183 = vld [vmem:[#allocation2 + $0xd0] sm:$0xff]
    %v1184 = vld [vmem:[#allocation2 + $0xd8] sm:$0xff]
    %v1185 = vpack.c.bf16 %v1180, %v1180
    %1186 = vmatprep.subr.bf16.mxu0 %v497
    %1187 = vmatpush1.bf16.msra.mxu0 %v496
    %1188 = vmatprep.subr.bf16.mxu0 %v493
    %1189 = vmatpush1.bf16.msra.mxu0 %v492
    %1190 = vmatprep.subr.bf16.mxu0 %v489
    %1191 = vmatpush1.bf16.msra.mxu0 %v488
    %1192 = vmatprep.subr.bf16.mxu0 %v485
    %1193 = vmatpush1.bf16.msra.mxu0 %v484
    %1194 = vmatprep.subr.bf16.mxu0 %v481
    %1195 = vmatpush1.bf16.msra.mxu0 %v480
    %1196 = vmatprep.subr.bf16.mxu0 %v477
    %1197 = vmatpush1.bf16.msra.mxu0 %v476
    %1198 = vmatprep.subr.bf16.mxu0 %v473
    %1199 = vmatpush1.bf16.msra.mxu0 %v472
    %1200 = vmatprep.subr.bf16.mxu0 %v469
    %1201 = vmatpush1.bf16.msra.mxu0 %v468
    %1202 = vmatprep.subr.bf16.mxu0 0
    %1203 = vmatpush2.bf16.msra.mxu0 0
    %1204 = vmatprep.subr.bf16.mxu0 0
    %1205 = vmatpush2.bf16.msra.mxu0 0
    %1206 = vmatprep.subr.bf16.mxu0 0
    %1207 = vmatpush2.bf16.msra.mxu0 0
    %1208 = vmatprep.subr.bf16.mxu0 0
    %1209 = vmatpush2.bf16.msra.mxu0 0
    %1210 = vmatprep.subr.bf16.mxu0 0
    %1211 = vmatpush2.bf16.msra.mxu0 0
    %1212 = vmatprep.subr.bf16.mxu0 0
    %1213 = vmatpush2.bf16.msra.mxu0 0
    %1214 = vmatprep.subr.bf16.mxu0 0
    %1215 = vmatpush2.bf16.msra.mxu0 0
    %1216 = vmatprep.subr.bf16.mxu0 0
    %1217 = vmatpush2.bf16.msra.mxu0 0
    %1218 = vmatprep.mubr.bf16.mxu0 0
    %1219 = vmatmul.mubr.bf16.gmra.mxu0 %v1185
    %v1220 = vpop.f32.mrf.mxu0
    %v1221 = vadd.f32 0.0, %v1220
    %v1222 = vpop.f32.mrf.mxu0
    %v1223 = vadd.f32 0.0, %v1222
    %v1224 = vpop.f32.mrf.mxu0
    %v1225 = vpop.f32.mrf.mxu0
    %1226 = vdwg.mxu0
    %1227 = vmatprep.subr.bf16.mxu0 %v499
    %1228 = vmatpush1.bf16.msra.mxu0 %v498
    %1229 = vmatprep.subr.bf16.mxu0 %v495
    %1230 = vmatpush1.bf16.msra.mxu0 %v494
    %1231 = vmatprep.subr.bf16.mxu0 %v491
    %1232 = vmatpush1.bf16.msra.mxu0 %v490
    %1233 = vmatprep.subr.bf16.mxu0 %v487
    %1234 = vmatpush1.bf16.msra.mxu0 %v486
    %1235 = vmatprep.subr.bf16.mxu0 %v483
    %1236 = vmatpush1.bf16.msra.mxu0 %v482
    %1237 = vmatprep.subr.bf16.mxu0 %v479
    %1238 = vmatpush1.bf16.msra.mxu0 %v478
    %1239 = vmatprep.subr.bf16.mxu0 %v475
    %1240 = vmatpush1.bf16.msra.mxu0 %v474
    %1241 = vmatprep.subr.bf16.mxu0 %v471
    %1242 = vmatpush1.bf16.msra.mxu0 %v470
    %1243 = vmatprep.subr.bf16.mxu0 0
    %1244 = vmatpush2.bf16.msra.mxu0 0
    %1245 = vmatprep.subr.bf16.mxu0 0
    %1246 = vmatpush2.bf16.msra.mxu0 0
    %1247 = vmatprep.subr.bf16.mxu0 0
    %1248 = vmatpush2.bf16.msra.mxu0 0
    %1249 = vmatprep.subr.bf16.mxu0 0
    %1250 = vmatpush2.bf16.msra.mxu0 0
    %1251 = vmatprep.subr.bf16.mxu0 0
    %1252 = vmatpush2.bf16.msra.mxu0 0
    %1253 = vmatprep.subr.bf16.mxu0 0
    %1254 = vmatpush2.bf16.msra.mxu0 0
    %1255 = vmatprep.subr.bf16.mxu0 0
    %1256 = vmatpush2.bf16.msra.mxu0 0
    %1257 = vmatprep.subr.bf16.mxu0 0
    %1258 = vmatpush2.bf16.msra.mxu0 0
    %1259 = vmatprep.mubr.bf16.mxu0 0
    %1260 = vmatmul.mubr.bf16.gmra.mxu0 %v1185
    %v1261 = vpop.f32.mrf.mxu0
    %v1262 = vadd.f32 0.0, %v1261
    %v1263 = vpop.f32.mrf.mxu0
    %v1264 = vadd.f32 0.0, %v1263
    %v1265 = vpop.f32.mrf.mxu0
    %v1266 = vpop.f32.mrf.mxu0
    %1267 = vdwg.mxu0
    %v1268 = vadd.f32 %v1181, %v1221
    %v1269 = vadd.f32 %v1182, %v1223
    %v1270 = vadd.f32 %v1183, %v1262
    %v1271 = vadd.f32 %v1184, %v1264
    %v1272 = vmul.f32 %v1268, 0.5
    %v1273 = vtanh.pop %v1272
    %v1274 = vadd.f32 %v1273, 1.0
    %v1275 = vmul.f32 %v1274, 0.5
    %v1276 = vmul.f32 %v1269, 0.5
    %v1277 = vtanh.pop %v1276
    %v1278 = vadd.f32 %v1277, 1.0
    %v1279 = vmul.f32 %v1278, 0.5
    %v1280 = vtanh.pop %v1270
    %v1281 = vmul.f32 %v1271, 0.5
    %v1282 = vtanh.pop %v1281
    %v1283 = vadd.f32 %v1282, 1.0
    %v1284 = vmul.f32 %v1283, 0.5
    %v1285 = vmul.f32 %v1279, %v1178
    %v1286 = vmul.f32 %v1275, %v1280
    %v1287 = vadd.f32 %v1285, %v1286
    %v1288 = vtanh.pop %v1287
    %v1289 = vmul.f32 %v1284, %v1288
    %v1290 = vld [vmem:[#allocation2 + $0xe0] sm:$0xff]
    %v1291 = vld [vmem:[#allocation2 + $0xe8] sm:$0xff]
    %v1292 = vld [vmem:[#allocation2 + $0xf0] sm:$0xff]
    %v1293 = vld [vmem:[#allocation2 + $0xf8] sm:$0xff]
    %v1294 = vpack.c.bf16 %v1289, %v1289
    %1295 = vmatprep.subr.bf16.mxu0 %v497
    %1296 = vmatpush1.bf16.msra.mxu0 %v496
    %1297 = vmatprep.subr.bf16.mxu0 %v493
    %1298 = vmatpush1.bf16.msra.mxu0 %v492
    %1299 = vmatprep.subr.bf16.mxu0 %v489
    %1300 = vmatpush1.bf16.msra.mxu0 %v488
    %1301 = vmatprep.subr.bf16.mxu0 %v485
    %1302 = vmatpush1.bf16.msra.mxu0 %v484
    %1303 = vmatprep.subr.bf16.mxu0 %v481
    %1304 = vmatpush1.bf16.msra.mxu0 %v480
    %1305 = vmatprep.subr.bf16.mxu0 %v477
    %1306 = vmatpush1.bf16.msra.mxu0 %v476
    %1307 = vmatprep.subr.bf16.mxu0 %v473
    %1308 = vmatpush1.bf16.msra.mxu0 %v472
    %1309 = vmatprep.subr.bf16.mxu0 %v469
    %1310 = vmatpush1.bf16.msra.mxu0 %v468
    %1311 = vmatprep.subr.bf16.mxu0 0
    %1312 = vmatpush2.bf16.msra.mxu0 0
    %1313 = vmatprep.subr.bf16.mxu0 0
    %1314 = vmatpush2.bf16.msra.mxu0 0
    %1315 = vmatprep.subr.bf16.mxu0 0
    %1316 = vmatpush2.bf16.msra.mxu0 0
    %1317 = vmatprep.subr.bf16.mxu0 0
    %1318 = vmatpush2.bf16.msra.mxu0 0
    %1319 = vmatprep.subr.bf16.mxu0 0
    %1320 = vmatpush2.bf16.msra.mxu0 0
    %1321 = vmatprep.subr.bf16.mxu0 0
    %1322 = vmatpush2.bf16.msra.mxu0 0
    %1323 = vmatprep.subr.bf16.mxu0 0
    %1324 = vmatpush2.bf16.msra.mxu0 0
    %1325 = vmatprep.subr.bf16.mxu0 0
    %1326 = vmatpush2.bf16.msra.mxu0 0
    %1327 = vmatprep.mubr.bf16.mxu0 0
    %1328 = vmatmul.mubr.bf16.gmra.mxu0 %v1294
    %v1329 = vpop.f32.mrf.mxu0
    %v1330 = vadd.f32 0.0, %v1329
    %v1331 = vpop.f32.mrf.mxu0
    %v1332 = vadd.f32 0.0, %v1331
    %v1333 = vpop.f32.mrf.mxu0
    %v1334 = vpop.f32.mrf.mxu0
    %1335 = vdwg.mxu0
    %1336 = vmatprep.subr.bf16.mxu0 %v499
    %1337 = vmatpush1.bf16.msra.mxu0 %v498
    %1338 = vmatprep.subr.bf16.mxu0 %v495
    %1339 = vmatpush1.bf16.msra.mxu0 %v494
    %1340 = vmatprep.subr.bf16.mxu0 %v491
    %1341 = vmatpush1.bf16.msra.mxu0 %v490
    %1342 = vmatprep.subr.bf16.mxu0 %v487
    %1343 = vmatpush1.bf16.msra.mxu0 %v486
    %1344 = vmatprep.subr.bf16.mxu0 %v483
    %1345 = vmatpush1.bf16.msra.mxu0 %v482
    %1346 = vmatprep.subr.bf16.mxu0 %v479
    %1347 = vmatpush1.bf16.msra.mxu0 %v478
    %1348 = vmatprep.subr.bf16.mxu0 %v475
    %1349 = vmatpush1.bf16.msra.mxu0 %v474
    %1350 = vmatprep.subr.bf16.mxu0 %v471
    %1351 = vmatpush1.bf16.msra.mxu0 %v470
    %1352 = vmatprep.subr.bf16.mxu0 0
    %1353 = vmatpush2.bf16.msra.mxu0 0
    %1354 = vmatprep.subr.bf16.mxu0 0
    %1355 = vmatpush2.bf16.msra.mxu0 0
    %1356 = vmatprep.subr.bf16.mxu0 0
    %1357 = vmatpush2.bf16.msra.mxu0 0
    %1358 = vmatprep.subr.bf16.mxu0 0
    %1359 = vmatpush2.bf16.msra.mxu0 0
    %1360 = vmatprep.subr.bf16.mxu0 0
    %1361 = vmatpush2.bf16.msra.mxu0 0
    %1362 = vmatprep.subr.bf16.mxu0 0
    %1363 = vmatpush2.bf16.msra.mxu0 0
    %1364 = vmatprep.subr.bf16.mxu0 0
    %1365 = vmatpush2.bf16.msra.mxu0 0
    %1366 = vmatprep.subr.bf16.mxu0 0
    %1367 = vmatpush2.bf16.msra.mxu0 0
    %1368 = vmatprep.mubr.bf16.mxu0 0
    %1369 = vmatmul.mubr.bf16.gmra.mxu0 %v1294
    %v1370 = vpop.f32.mrf.mxu0
    %v1371 = vadd.f32 0.0, %v1370
    %v1372 = vpop.f32.mrf.mxu0
    %v1373 = vadd.f32 0.0, %v1372
    %v1374 = vpop.f32.mrf.mxu0
    %v1375 = vpop.f32.mrf.mxu0
    %1376 = vdwg.mxu0
    %v1377 = vadd.f32 %v1290, %v1330
    %v1378 = vadd.f32 %v1291, %v1332
    %v1379 = vadd.f32 %v1292, %v1371
    %v1380 = vadd.f32 %v1293, %v1373
    %v1381 = vmul.f32 %v1377, 0.5
    %v1382 = vtanh.pop %v1381
    %v1383 = vadd.f32 %v1382, 1.0
    %v1384 = vmul.f32 %v1383, 0.5
    %v1385 = vmul.f32 %v1378, 0.5
    %v1386 = vtanh.pop %v1385
    %v1387 = vadd.f32 %v1386, 1.0
    %v1388 = vmul.f32 %v1387, 0.5
    %v1389 = vtanh.pop %v1379
    %v1390 = vmul.f32 %v1380, 0.5
    %v1391 = vtanh.pop %v1390
    %v1392 = vadd.f32 %v1391, 1.0
    %v1393 = vmul.f32 %v1392, 0.5
    %v1394 = vmul.f32 %v1388, %v1287
    %v1395 = vmul.f32 %v1384, %v1389
    %v1396 = vadd.f32 %v1394, %v1395
    %v1397 = vtanh.pop %v1396
    %v1398 = vmul.f32 %v1393, %v1397
    %1399 = vst [vmem:[#allocation8] sm:$0xff] %v1398
    // Predicated region
    $region26: #{tpu_custom_call.1} parent=1 // pred_check
      _
    $region27: #{tpu_custom_call.1} parent=1 // pred_check_branch
      %1401 = sbr.rel (0) target = $region29
    $region28: #{tpu_custom_call.1} parent=1 // pred_region
      %s1403 = ssub.s32 128, 128
      %1404 = vsyncadd [#allocation5], %s1403
      %s1406 = sshll.u32 [#allocation8], 4
      %s1407 = int_to_ptr.vmem [resolvable:$true] %s1406
      %1409 = dma.vmem_to_hbm [thread:$0]  %s1407, 128, %s4, [#allocation5]
    $region29: #{tpu_custom_call.1} parent=1 // pred_fallthru
      _
    // Predicated region
    $region30: #{tpu_custom_call.1} parent=1 // pred_check
      _
    $region31: #{tpu_custom_call.1} parent=1 // pred_check_branch
      %1411 = sbr.rel (0) target = $region33
    $region32: #{tpu_custom_call.1} parent=1 // pred_region
      %1412 = dma.done [#allocation5], 128
    $region33: #{tpu_custom_call.1} parent=1 // pred_fallthru
      _
    %1413 = vsyncpa [#allocation4], 1
    %1414 = vsyncpa [#allocation7], 1
    %1415 = vsyncpa [#allocation5], 1

</llo_original>
